<compile_context>
chip_gen: v7x
topology: tpu7x:2x2x1
jax: 0.10.0
libtpu: 0.0.40
codegen_flags: <defaults>
</compile_context>

<pallas_src>
import functools

import numpy as np

import jax
import jax.numpy as jnp
from jax import lax
from jax.experimental import pallas as pl
from jax.experimental.pallas import tpu as pltpu

# --------------------------- model config (small synthetic instance) ------------------
K_LAYERS = 3      # depth K (paper default 20)
F_CH = 8          # channels F (paper default 64); kept a multiple of 8 (sublane tile)
TOL = 1e-4        # power-iteration tolerance (module's self.tol)
MAX_ITER = 50     # power-iteration max iterations (module's self.max_iter)
C_PAD = 8         # image channel dim (3) padded to the 8-sublane tile

_TAPS = tuple((dy, dx) for dy in (-1, 0, 1) for dx in (-1, 0, 1))


# --------------------------------- layout helpers -------------------------------------
def _round_up(v, m):
    return ((v + m - 1) // m) * m


def _pixel_coords(N, H, W):
    """(2, N*H*W) int32 [row; col] per flattened pixel — the only mask metadata shipped
    to the kernels (the 9 per-tap boundary masks are rebuilt in-kernel from compares)."""
    HW = H * W
    q = np.arange(N * HW)
    pix = q % HW
    yy = (pix // W).astype(np.int32)
    xx = (pix % W).astype(np.int32)
    return jnp.asarray(np.stack([yy, xx], axis=0))


def _to_channels_major(x_nchw, c_pad):
    """NCHW -> (c_pad, N*H*W) channels-major flattened, channels zero-padded."""
    N, C, H, W = x_nchw.shape
    x_cl = jnp.reshape(jnp.transpose(x_nchw, (1, 0, 2, 3)), (C, N * H * W))
    return jnp.pad(x_cl.astype(jnp.float32), ((0, c_pad - C), (0, 0)))


def _from_channels_major(x_cl, N, C, H, W):
    return jnp.transpose(jnp.reshape(x_cl[:C], (C, N, H, W)), (1, 0, 2, 3))


def _prep_weight_mats(weights_hwio, c_pad):
    """HWIO (K,3,3,C,F) ->
         wmats (K, 9, F, c_pad): forward per-tap matrices W_t[f, c]
         wadj  (K, 9*c_pad, F) : adjoint stacked matrices; rows [t*cp:(t+1)*cp] hold the
                                 spatially-flipped, channel-transposed tap (exact adjoint
                                 of the Conv2d, i.e. the shared-weight ConvTranspose2d)."""
    K, _, _, C, F = weights_hwio.shape
    w_f = jnp.pad(weights_hwio.astype(jnp.float32),
                  ((0, 0), (0, 0), (0, 0), (0, c_pad - C), (0, 0)))        # (K,3,3,cp,F)
    wmats = jnp.reshape(jnp.transpose(w_f, (0, 1, 2, 4, 3)), (K, 9, F, c_pad))
    wadj = jnp.reshape(w_f[:, ::-1, ::-1], (K, 9 * c_pad, F))
    return wmats, wadj


# ----------------------------- in-kernel conv building blocks --------------------------
def _tap_masks(yy, xx, H, W):
    """9 boundary masks (center = None).  mask_t[q] = 1 iff source pixel (row+dy, col+dx)
    of output pixel q lies inside the same image (zero-padded 'same' conv); also stops
    lane rolls from leaking across the concatenated images."""
    masks = []
    for dy, dx in _TAPS:
        if dy == 0 and dx == 0:
            masks.append(None)
        else:
            ok = (yy >= -dy) & (yy < H - dy) & (xx >= -dx) & (xx < W - dx)
            masks.append(ok.astype(jnp.float32))
    return masks


def _conv_fwd(x, w_taps, masks, *, W, NHW):
    """3x3 'same' conv, channels-major: x (cp, NHW), w_taps (9, F, cp) -> (F, NHW).
    Streams 9 per-tap partial MXU dots on the lane-rolled, masked input (no im2col)."""
    acc = None
    for t, (dy, dx) in enumerate(_TAPS):
        s = dy * W + dx
        shifted = x if s == 0 else pltpu.roll(x, shift=(-s) % NHW, axis=1)
        if masks[t] is not None:
            shifted = shifted * masks[t]
        part = jnp.dot(w_taps[t], shifted, preferred_element_type=jnp.float32)
        acc = part if acc is None else acc + part
    return acc


def _conv_adj(u, wadj_stack, masks, *, W, NHW, cp):
    """Adjoint (transposed) 3x3 conv: u (F, NHW), wadj_stack (9*cp, F) -> (cp, NHW).
    One stacked MXU dot on the UNSHIFTED u, then roll/mask/accumulate the small
    (cp, NHW) per-tap partial outputs — rolls act on cp rows, never on F rows."""
    p = jnp.dot(wadj_stack, u, preferred_element_type=jnp.float32)      # (9*cp, NHW)
    acc = None
    for t, (dy, dx) in enumerate(_TAPS):
        s = dy * W + dx
        pt = p[t * cp:(t + 1) * cp, :]
        shifted = pt if s == 0 else pltpu.roll(pt, shift=(-s) % NHW, axis=1)
        if masks[t] is not None:
            shifted = shifted * masks[t]
        acc = shifted if acc is None else acc + shifted
    return acc


# --------------------------------- Pallas kernels --------------------------------------
def _power_kernel(xt0_ref, w_ref, wadj_ref, coords_ref, out_ref, xt_ref, *,
                  H, W, NHW, cp, max_iter, tol):
    """Whole power iteration for one layer, inside the kernel.
    xt stays in VMEM scratch; the data-dependent `break` is replaced by a branchless
    convergence-freeze flag (kept in the vector domain), so control flow is a fixed-trip
    fori_loop.  Output: frozen ||D^T D xt||^2 broadcast into a (1, 8, 128) tile."""
    yy = coords_ref[0:1, :]
    xx = coords_ref[1:2, :]
    masks = _tap_masks(yy, xx, H, W)           # loop-invariant, built once
    w_taps = w_ref[0]                          # (9, F, cp)
    wadj = wadj_ref[0]                         # (9*cp, F)
    xt_ref[...] = xt0_ref[0]

    lo = (1.0 - tol) ** 2
    hi = (1.0 + tol) ** 2
    one = jnp.ones((1, 1), jnp.float32)

    def body(_, carry):
        ssq_old, active = carry                               # (1,1) f32 each
        xt = xt_ref[...] * lax.rsqrt(ssq_old)                 # deferred normalization
        y = _conv_fwd(xt, w_taps, masks, W=W, NHW=NHW)        # (F, NHW), stays in VMEM
        z = _conv_adj(y, wadj, masks, W=W, NHW=NHW, cp=cp)    # (cp, NHW)
        ssq_new = jnp.sum(z * z, keepdims=True)               # (1,1)
        r = ssq_new / ssq_old
        # torch: rel = |sqrt(r) - 1| < tol  <=>  (1-tol)^2 < r < (1+tol)^2
        conv_now = jnp.logical_and(r > lo, r < hi).astype(jnp.float32)
        # commit this iteration only while still active (matches torch's break-after-update)
        ssq = active * ssq_new + (1.0 - active) * ssq_old
        xt_ref[...] = active * z + (1.0 - active) * xt_ref[...]
        active = active * (1.0 - conv_now)
        return ssq, active

    ssq_fin, _ = lax.fori_loop(0, max_iter, body, (one, one))
    out_ref[...] = jnp.zeros((1, 8, 128), jnp.float32) + jnp.reshape(ssq_fin, (1, 1, 1))


def _layer_kernel(x0_ref, w_ref, wadj_ref, sc_ref, coords_ref, x_out_ref,
                  u_scr, xprev_scr, *, H, W, NHW, cp, lim):
    """One grid step = one unrolled DScCP layer.  x_curr lives in the resident output
    block, x_prev / u in VMEM scratch — the carried state never leaves VMEM across k."""
    k = pl.program_id(0)
    yy = coords_ref[0:1, :]
    xx = coords_ref[1:2, :]
    masks = _tap_masks(yy, xx, H, W)
    w_taps = w_ref[0]                          # (9, F, cp)
    wadj = wadj_ref[0]                         # (9*cp, F)
    x0 = x0_ref[...]

    @pl.when(k == 0)
    def _init():
        xprev_scr[...] = x0
        x_out_ref[...] = x0
        u_scr[...] = _conv_fwd(x0, w_taps, masks, W=W, NHW=NHW)   # u = conv[0](x)

    alpha = sc_ref[k, 0]        # 1/sqrt(1 + 2*gamma*mu_k)
    coeff = sc_ref[k, 1]        # tau_k / mu_k
    a = sc_ref[k, 2]            # mu_k / (1 + mu_k)
    b = sc_ref[k, 3]            # 1 / (1 + mu_k)

    x_curr = x_out_ref[...]
    x_prev = xprev_scr[...]
    xcomb = (1.0 + alpha) * x_curr - alpha * x_prev
    y = _conv_fwd(xcomb, w_taps, masks, W=W, NHW=NHW)
    u_new = jnp.clip(u_scr[...] + coeff * y, -lim, lim)           # hardtanh(+-sigma^2)
    u_scr[...] = u_new
    z = _conv_adj(u_new, wadj, masks, W=W, NHW=NHW, cp=cp)
    x_next = jnp.clip(a * x0 + b * x_curr - a * z, 0.0, 1.0)
    xprev_scr[...] = x_curr
    x_out_ref[...] = x_next


# sanity-check-only kernels (single invocation, used in __main__ to validate the conv math)
def _conv_fwd_only_kernel(x_ref, w_ref, coords_ref, out_ref, *, H, W, NHW):
    masks = _tap_masks(coords_ref[0:1, :], coords_ref[1:2, :], H, W)
    out_ref[...] = _conv_fwd(x_ref[...], w_ref[...], masks, W=W, NHW=NHW)


def _conv_adj_only_kernel(u_ref, wadj_ref, coords_ref, out_ref, *, H, W, NHW, cp):
    masks = _tap_masks(coords_ref[0:1, :], coords_ref[1:2, :], H, W)
    out_ref[...] = _conv_adj(u_ref[...], wadj_ref[...], masks, W=W, NHW=NHW, cp=cp)


# ------------------------------------ wrappers -----------------------------------------
def _vmem():
    return pl.BlockSpec(memory_space=pltpu.MemorySpace.VMEM)


def _power_call(xt0, wmats, wadj, coords, *, H, W, max_iter, tol):
    """All K power iterations in ONE pallas_call; grid axis over k is parallel."""
    K, cp, NHW = xt0.shape
    F = wmats.shape[2]
    out = pl.pallas_call(
        functools.partial(_power_kernel, H=H, W=W, NHW=NHW, cp=cp,
                          max_iter=max_iter, tol=tol),
        out_shape=jax.ShapeDtypeStruct((K, 8, 128), jnp.float32),
        grid=(K,),
        in_specs=[
            pl.BlockSpec((1, cp, NHW), lambda k: (k, 0, 0)),        # xt0[k]
            pl.BlockSpec((1, 9, F, cp), lambda k: (k, 0, 0, 0)),    # fwd weights[k]
            pl.BlockSpec((1, 9 * cp, F), lambda k: (k, 0, 0)),      # adj weights[k]
            pl.BlockSpec((2, NHW), lambda k: (0, 0)),               # coords (resident)
        ],
        out_specs=pl.BlockSpec((1, 8, 128), lambda k: (k, 0, 0)),
        scratch_shapes=[pltpu.VMEM((cp, NHW), jnp.float32)],
        compiler_params=pltpu.CompilerParams(
            dimension_semantics=("parallel",)),
    )(xt0, wmats, wadj, coords)
    return out[:, 0, 0]                                             # (K,) = ||.||^2


def _layers_call(x_cl, wmats, wadj, scalars, coords, *, H, W, lim):
    """All K unrolled layers in ONE pallas_call; state carried in VMEM across k."""
    cp, NHW = x_cl.shape
    K = wmats.shape[0]
    F = wmats.shape[2]
    return pl.pallas_call(
        functools.partial(_layer_kernel, H=H, W=W, NHW=NHW, cp=cp, lim=lim),
        out_shape=jax.ShapeDtypeStruct((cp, NHW), jnp.float32),
        grid=(K,),
        in_specs=[
            pl.BlockSpec((cp, NHW), lambda k: (0, 0)),              # x0 (resident)
            pl.BlockSpec((1, 9, F, cp), lambda k: (k, 0, 0, 0)),    # fwd weights[k]
            pl.BlockSpec((1, 9 * cp, F), lambda k: (k, 0, 0)),      # adj weights[k]
            pl.BlockSpec(memory_space=pltpu.MemorySpace.SMEM),      # (K,4) scalars
            pl.BlockSpec((2, NHW), lambda k: (0, 0)),               # coords (resident)
        ],
        out_specs=pl.BlockSpec((cp, NHW), lambda k: (0, 0)),        # resident accumulator
        scratch_shapes=[pltpu.VMEM((F, NHW), jnp.float32),          # u (carried)
                        pltpu.VMEM((cp, NHW), jnp.float32)],        # x_prev (carried)
        compiler_params=pltpu.CompilerParams(
            dimension_semantics=("arbitrary",)),
    )(x_cl, wmats, wadj, scalars, coords)


def conv_fwd_cl(x_cl, w_taps, coords, H, W):
    cp, NHW = x_cl.shape
    F = w_taps.shape[1]
    return pl.pallas_call(
        functools.partial(_conv_fwd_only_kernel, H=H, W=W, NHW=NHW),
        out_shape=jax.ShapeDtypeStruct((F, NHW), jnp.float32),
        in_specs=[_vmem(), _vmem(), _vmem()],
        out_specs=_vmem(),
    )(x_cl, w_taps, coords)


def conv_adj_cl(u_cl, wadj_k, coords, H, W):
    F, NHW = u_cl.shape
    cp = wadj_k.shape[0] // 9
    return pl.pallas_call(
        functools.partial(_conv_adj_only_kernel, H=H, W=W, NHW=NHW, cp=cp),
        out_shape=jax.ShapeDtypeStruct((cp, NHW), jnp.float32),
        in_specs=[_vmem(), _vmem(), _vmem()],
        out_specs=_vmem(),
    )(u_cl, wadj_k, coords)


# ----------------------------------- forward pass --------------------------------------
@functools.partial(jax.jit, static_argnames=("sigma",))
def dsccp_forward(x_nchw, weights_hwio, mu, key, sigma=0.03):
    """DScCP forward. x_nchw: (N, 3, H, W) float32 (NCHW, like the PyTorch module)."""
    N, C, H, W = x_nchw.shape
    NHW = N * H * W
    K = weights_hwio.shape[0]
    cp = _round_up(C, 8)
    sig2 = float(sigma) ** 2
    gamma = 1.0

    coords = _pixel_coords(N, H, W)                      # (2, NHW) int32, compile const
    x_cl = _to_channels_major(x_nchw, cp)                # (cp, NHW) lane-dense
    wmats, wadj = _prep_weight_mats(weights_hwio, cp)

    # Power-iteration start vectors (one per layer), unit-normalized like torch.
    # TODO(synk): torch uses the global RNG (randn_like); we use an explicit fixed key.
    xt0 = jax.random.normal(key, (K, C, NHW), jnp.float32)
    xt0 = xt0 / jnp.sqrt(jnp.sum(xt0 * xt0, axis=(1, 2), keepdims=True))
    xt0 = jnp.pad(xt0, ((0, 0), (0, cp - C), (0, 0)))    # zero pad rows stay zero

    # 1 launch: all K power iterations (spectral norms of D_k^T D_k).
    vals_sq = _power_call(xt0, wmats, wadj, coords, H=H, W=W,
                          max_iter=MAX_ITER, tol=TOL)    # (K,)
    val = jnp.sqrt(vals_sq)
    tau = 0.99 / val

    alphak = 1.0 / jnp.sqrt(1.0 + 2.0 * gamma * mu)
    scalars = jnp.stack([alphak, tau / mu, mu / (mu + 1.0), 1.0 / (1.0 + mu)],
                        axis=1).astype(jnp.float32)      # (K, 4)

    # 1 launch: all K unrolled layers (state resident in VMEM across k).
    x_fin = _layers_call(x_cl, wmats, wadj, scalars, coords, H=H, W=W, lim=sig2)
    return _from_channels_major(x_fin, N, C, H, W)       # back to NCHW


# ---------------------------------------- main ------------------------------------------
if __name__ == "__main__":
    key = jax.random.PRNGKey(0)
    kw, kx, ku, kp = jax.random.split(key, 4)

    # Kaiming-normal (relu) init of the K shared conv weights, torch OIHW = (F, 3, 3, 3).
    std = (2.0 / (3 * 3 * 3)) ** 0.5
    w_oihw = jax.random.normal(kw, (K_LAYERS, F_CH, 3, 3, 3), jnp.float32) * std
    weights_hwio = jnp.transpose(w_oihw, (0, 3, 4, 2, 1))   # (K, 3, 3, Cin=3, Cout=F)
    mu = jnp.ones((K_LAYERS,), jnp.float32)                 # nn.Parameter(torch.ones(K))

    # noisy image batch, NCHW like the PyTorch module (module fixes channels = 3)
    x = jax.random.uniform(kx, (2, 3, 16, 16), jnp.float32)
    N, C, H, W = x.shape
    NHW = N * H * W

    # --- sanity checks of the in-kernel conv math -------------------------------------
    coords = _pixel_coords(N, H, W)
    x_cl = _to_channels_major(x, C_PAD)
    wmats, wadj = _prep_weight_mats(weights_hwio, C_PAD)

    # forward conv vs XLA "SAME" conv
    got_cl = conv_fwd_cl(x_cl, wmats[0], coords, H, W)                       # (F, NHW)
    got = jnp.transpose(jnp.reshape(got_cl, (F_CH, N, H, W)), (1, 2, 3, 0))  # NHWC
    ref = lax.conv_general_dilated(
        jnp.transpose(x, (0, 2, 3, 1)), weights_hwio[0], (1, 1), "SAME",
        dimension_numbers=("NHWC", "HWIO", "NHWC"))
    assert float(jnp.max(jnp.abs(got - ref))) < 1e-3, "pallas forward conv mismatch"

    # adjoint conv is the exact adjoint of the forward conv: <u, Dx> == <D^T u, x>
    u = jax.random.normal(ku, (F_CH, NHW), jnp.float32)
    z_cl = conv_adj_cl(u, wadj[0], coords, H, W)                             # (cp, NHW)
    lhs = float(jnp.sum(u * got_cl))
    rhs = float(jnp.sum(x_cl * z_cl))
    denom = float(jnp.sqrt(jnp.sum(u * u) * jnp.sum(got_cl * got_cl))) + 1e-6
    assert abs(lhs - rhs) < 1e-4 * denom + 1e-4, "pallas adjoint conv mismatch"

    # --- full forward ------------------------------------------------------------------
    out = dsccp_forward(x, weights_hwio, mu, kp, sigma=0.03)
    out = jax.block_until_ready(out)
    assert out.shape == x.shape
    assert bool(jnp.all(jnp.isfinite(out)))
    print("KERNEL_OK")
</pallas_src>

<mosaic_0001>
module attributes {stable_mosaic.version = 11 : i64} {
  func.func @_conv_fwd_only_kernel(%arg0: memref<8x512xf32, #tpu.memory_space<vmem>>, %arg1: memref<9x8x8xf32, #tpu.memory_space<vmem>>, %arg2: memref<2x512xi32, #tpu.memory_space<vmem>>, %arg3: memref<8x512xf32, #tpu.memory_space<vmem>>) attributes {dimension_semantics = [], scalar_prefetch = 0 : i64, scratch_operands = 0 : i64, tpu.core_type = #tpu.core_type<tc>} {
    %c0 = arith.constant 0 : index
    %c0_0 = arith.constant 0 : index
    %0 = vector.load %arg2[%c0, %c0_0] : memref<2x512xi32, #tpu.memory_space<vmem>>, vector<1x512xi32>
    %c1 = arith.constant 1 : index
    %c0_1 = arith.constant 0 : index
    %1 = vector.load %arg2[%c1, %c0_1] : memref<2x512xi32, #tpu.memory_space<vmem>>, vector<1x512xi32>
    %c1_i32 = arith.constant 1 : i32
    %2 = vector.broadcast %c1_i32 : i32 to vector<1x512xi32>
    %3 = arith.cmpi sge, %0, %2 : vector<1x512xi32>
    %c17_i32 = arith.constant 17 : i32
    %4 = vector.broadcast %c17_i32 : i32 to vector<1x512xi32>
    %5 = arith.cmpi slt, %0, %4 : vector<1x512xi32>
    %6 = arith.andi %3, %5 : vector<1x512xi1>
    %c1_i32_2 = arith.constant 1 : i32
    %7 = vector.broadcast %c1_i32_2 : i32 to vector<1x512xi32>
    %8 = arith.cmpi sge, %1, %7 : vector<1x512xi32>
    %9 = arith.andi %6, %8 : vector<1x512xi1>
    %c17_i32_3 = arith.constant 17 : i32
    %10 = vector.broadcast %c17_i32_3 : i32 to vector<1x512xi32>
    %11 = arith.cmpi slt, %1, %10 : vector<1x512xi32>
    %12 = arith.andi %9, %11 : vector<1x512xi1>
    %13 = arith.extui %12 : vector<1x512xi1> to vector<1x512xi32>
    %14 = arith.sitofp %13 : vector<1x512xi32> to vector<1x512xf32>
    %c1_i32_4 = arith.constant 1 : i32
    %15 = vector.broadcast %c1_i32_4 : i32 to vector<1x512xi32>
    %16 = arith.cmpi sge, %0, %15 : vector<1x512xi32>
    %c17_i32_5 = arith.constant 17 : i32
    %17 = vector.broadcast %c17_i32_5 : i32 to vector<1x512xi32>
    %18 = arith.cmpi slt, %0, %17 : vector<1x512xi32>
    %19 = arith.andi %16, %18 : vector<1x512xi1>
    %c0_i32 = arith.constant 0 : i32
    %20 = vector.broadcast %c0_i32 : i32 to vector<1x512xi32>
    %21 = arith.cmpi sge, %1, %20 : vector<1x512xi32>
    %22 = arith.andi %19, %21 : vector<1x512xi1>
    %c16_i32 = arith.constant 16 : i32
    %23 = vector.broadcast %c16_i32 : i32 to vector<1x512xi32>
    %24 = arith.cmpi slt, %1, %23 : vector<1x512xi32>
    %25 = arith.andi %22, %24 : vector<1x512xi1>
    %26 = arith.extui %25 : vector<1x512xi1> to vector<1x512xi32>
    %27 = arith.sitofp %26 : vector<1x512xi32> to vector<1x512xf32>
    %c1_i32_6 = arith.constant 1 : i32
    %28 = vector.broadcast %c1_i32_6 : i32 to vector<1x512xi32>
    %29 = arith.cmpi sge, %0, %28 : vector<1x512xi32>
    %c17_i32_7 = arith.constant 17 : i32
    %30 = vector.broadcast %c17_i32_7 : i32 to vector<1x512xi32>
    %31 = arith.cmpi slt, %0, %30 : vector<1x512xi32>
    %32 = arith.andi %29, %31 : vector<1x512xi1>
    %c-1_i32 = arith.constant -1 : i32
    %33 = vector.broadcast %c-1_i32 : i32 to vector<1x512xi32>
    %34 = arith.cmpi sge, %1, %33 : vector<1x512xi32>
    %35 = arith.andi %32, %34 : vector<1x512xi1>
    %c15_i32 = arith.constant 15 : i32
    %36 = vector.broadcast %c15_i32 : i32 to vector<1x512xi32>
    %37 = arith.cmpi slt, %1, %36 : vector<1x512xi32>
    %38 = arith.andi %35, %37 : vector<1x512xi1>
    %39 = arith.extui %38 : vector<1x512xi1> to vector<1x512xi32>
    %40 = arith.sitofp %39 : vector<1x512xi32> to vector<1x512xf32>
    %c0_i32_8 = arith.constant 0 : i32
    %41 = vector.broadcast %c0_i32_8 : i32 to vector<1x512xi32>
    %42 = arith.cmpi sge, %0, %41 : vector<1x512xi32>
    %c16_i32_9 = arith.constant 16 : i32
    %43 = vector.broadcast %c16_i32_9 : i32 to vector<1x512xi32>
    %44 = arith.cmpi slt, %0, %43 : vector<1x512xi32>
    %45 = arith.andi %42, %44 : vector<1x512xi1>
    %c1_i32_10 = arith.constant 1 : i32
    %46 = vector.broadcast %c1_i32_10 : i32 to vector<1x512xi32>
    %47 = arith.cmpi sge, %1, %46 : vector<1x512xi32>
    %48 = arith.andi %45, %47 : vector<1x512xi1>
    %c17_i32_11 = arith.constant 17 : i32
    %49 = vector.broadcast %c17_i32_11 : i32 to vector<1x512xi32>
    %50 = arith.cmpi slt, %1, %49 : vector<1x512xi32>
    %51 = arith.andi %48, %50 : vector<1x512xi1>
    %52 = arith.extui %51 : vector<1x512xi1> to vector<1x512xi32>
    %53 = arith.sitofp %52 : vector<1x512xi32> to vector<1x512xf32>
    %c0_i32_12 = arith.constant 0 : i32
    %54 = vector.broadcast %c0_i32_12 : i32 to vector<1x512xi32>
    %55 = arith.cmpi sge, %0, %54 : vector<1x512xi32>
    %c16_i32_13 = arith.constant 16 : i32
    %56 = vector.broadcast %c16_i32_13 : i32 to vector<1x512xi32>
    %57 = arith.cmpi slt, %0, %56 : vector<1x512xi32>
    %58 = arith.andi %55, %57 : vector<1x512xi1>
    %c-1_i32_14 = arith.constant -1 : i32
    %59 = vector.broadcast %c-1_i32_14 : i32 to vector<1x512xi32>
    %60 = arith.cmpi sge, %1, %59 : vector<1x512xi32>
    %61 = arith.andi %58, %60 : vector<1x512xi1>
    %c15_i32_15 = arith.constant 15 : i32
    %62 = vector.broadcast %c15_i32_15 : i32 to vector<1x512xi32>
    %63 = arith.cmpi slt, %1, %62 : vector<1x512xi32>
    %64 = arith.andi %61, %63 : vector<1x512xi1>
    %65 = arith.extui %64 : vector<1x512xi1> to vector<1x512xi32>
    %66 = arith.sitofp %65 : vector<1x512xi32> to vector<1x512xf32>
    %c-1_i32_16 = arith.constant -1 : i32
    %67 = vector.broadcast %c-1_i32_16 : i32 to vector<1x512xi32>
    %68 = arith.cmpi sge, %0, %67 : vector<1x512xi32>
    %c15_i32_17 = arith.constant 15 : i32
    %69 = vector.broadcast %c15_i32_17 : i32 to vector<1x512xi32>
    %70 = arith.cmpi slt, %0, %69 : vector<1x512xi32>
    %71 = arith.andi %68, %70 : vector<1x512xi1>
    %c1_i32_18 = arith.constant 1 : i32
    %72 = vector.broadcast %c1_i32_18 : i32 to vector<1x512xi32>
    %73 = arith.cmpi sge, %1, %72 : vector<1x512xi32>
    %74 = arith.andi %71, %73 : vector<1x512xi1>
    %c17_i32_19 = arith.constant 17 : i32
    %75 = vector.broadcast %c17_i32_19 : i32 to vector<1x512xi32>
    %76 = arith.cmpi slt, %1, %75 : vector<1x512xi32>
    %77 = arith.andi %74, %76 : vector<1x512xi1>
    %78 = arith.extui %77 : vector<1x512xi1> to vector<1x512xi32>
    %79 = arith.sitofp %78 : vector<1x512xi32> to vector<1x512xf32>
    %c-1_i32_20 = arith.constant -1 : i32
    %80 = vector.broadcast %c-1_i32_20 : i32 to vector<1x512xi32>
    %81 = arith.cmpi sge, %0, %80 : vector<1x512xi32>
    %c15_i32_21 = arith.constant 15 : i32
    %82 = vector.broadcast %c15_i32_21 : i32 to vector<1x512xi32>
    %83 = arith.cmpi slt, %0, %82 : vector<1x512xi32>
    %84 = arith.andi %81, %83 : vector<1x512xi1>
    %c0_i32_22 = arith.constant 0 : i32
    %85 = vector.broadcast %c0_i32_22 : i32 to vector<1x512xi32>
    %86 = arith.cmpi sge, %1, %85 : vector<1x512xi32>
    %87 = arith.andi %84, %86 : vector<1x512xi1>
    %c16_i32_23 = arith.constant 16 : i32
    %88 = vector.broadcast %c16_i32_23 : i32 to vector<1x512xi32>
    %89 = arith.cmpi slt, %1, %88 : vector<1x512xi32>
    %90 = arith.andi %87, %89 : vector<1x512xi1>
    %91 = arith.extui %90 : vector<1x512xi1> to vector<1x512xi32>
    %92 = arith.sitofp %91 : vector<1x512xi32> to vector<1x512xf32>
    %c-1_i32_24 = arith.constant -1 : i32
    %93 = vector.broadcast %c-1_i32_24 : i32 to vector<1x512xi32>
    %94 = arith.cmpi sge, %0, %93 : vector<1x512xi32>
    %c15_i32_25 = arith.constant 15 : i32
    %95 = vector.broadcast %c15_i32_25 : i32 to vector<1x512xi32>
    %96 = arith.cmpi slt, %0, %95 : vector<1x512xi32>
    %97 = arith.andi %94, %96 : vector<1x512xi1>
    %c-1_i32_26 = arith.constant -1 : i32
    %98 = vector.broadcast %c-1_i32_26 : i32 to vector<1x512xi32>
    %99 = arith.cmpi sge, %1, %98 : vector<1x512xi32>
    %100 = arith.andi %97, %99 : vector<1x512xi1>
    %c15_i32_27 = arith.constant 15 : i32
    %101 = vector.broadcast %c15_i32_27 : i32 to vector<1x512xi32>
    %102 = arith.cmpi slt, %1, %101 : vector<1x512xi32>
    %103 = arith.andi %100, %102 : vector<1x512xi1>
    %104 = arith.extui %103 : vector<1x512xi1> to vector<1x512xi32>
    %105 = arith.sitofp %104 : vector<1x512xi32> to vector<1x512xf32>
    %c0_28 = arith.constant 0 : index
    %c0_29 = arith.constant 0 : index
    %106 = vector.load %arg0[%c0_28, %c0_29] : memref<8x512xf32, #tpu.memory_space<vmem>>, vector<8x512xf32>
    %c0_30 = arith.constant 0 : index
    %c0_31 = arith.constant 0 : index
    %c0_32 = arith.constant 0 : index
    %107 = vector.load %arg1[%c0_30, %c0_31, %c0_32] : memref<9x8x8xf32, #tpu.memory_space<vmem>>, vector<9x8x8xf32>
    %c17_i32_33 = arith.constant 17 : i32
    %108 = tpu.dynamic_rotate %106 by %c17_i32_33 dim 1 : vector<8x512xf32>, i32 -> vector<8x512xf32>
    %109 = vector.broadcast %14 : vector<1x512xf32> to vector<8x512xf32>
    %110 = arith.mulf %108, %109 : vector<8x512xf32>
    %111 = vector.extract_strided_slice %107 {offsets = [0, 0, 0], sizes = [1, 8, 8], strides = [1, 1, 1]} : vector<9x8x8xf32> to vector<1x8x8xf32>
    %112 = vector.shape_cast %111 : vector<1x8x8xf32> to vector<8x8xf32>
    %cst = arith.constant dense<0.000000e+00> : vector<8x512xf32>
    %113 = tpu.matmul %112, %110, %cst {dimension_numbers = #tpu.dot_dimension_numbers<[1], [0], [0], [1], [0, 0, 1, 1], [], []>} : vector<8x8xf32>, vector<8x512xf32>, vector<8x512xf32> -> vector<8x512xf32>
    %c16_i32_34 = arith.constant 16 : i32
    %114 = tpu.dynamic_rotate %106 by %c16_i32_34 dim 1 : vector<8x512xf32>, i32 -> vector<8x512xf32>
    %115 = vector.broadcast %27 : vector<1x512xf32> to vector<8x512xf32>
    %116 = arith.mulf %114, %115 : vector<8x512xf32>
    %117 = vector.extract_strided_slice %107 {offsets = [1, 0, 0], sizes = [1, 8, 8], strides = [1, 1, 1]} : vector<9x8x8xf32> to vector<1x8x8xf32>
    %118 = vector.shape_cast %117 : vector<1x8x8xf32> to vector<8x8xf32>
    %cst_35 = arith.constant dense<0.000000e+00> : vector<8x512xf32>
    %119 = tpu.matmul %118, %116, %cst_35 {dimension_numbers = #tpu.dot_dimension_numbers<[1], [0], [0], [1], [0, 0, 1, 1], [], []>} : vector<8x8xf32>, vector<8x512xf32>, vector<8x512xf32> -> vector<8x512xf32>
    %120 = arith.addf %113, %119 : vector<8x512xf32>
    %c15_i32_36 = arith.constant 15 : i32
    %121 = tpu.dynamic_rotate %106 by %c15_i32_36 dim 1 : vector<8x512xf32>, i32 -> vector<8x512xf32>
    %122 = vector.broadcast %40 : vector<1x512xf32> to vector<8x512xf32>
    %123 = arith.mulf %121, %122 : vector<8x512xf32>
    %124 = vector.extract_strided_slice %107 {offsets = [2, 0, 0], sizes = [1, 8, 8], strides = [1, 1, 1]} : vector<9x8x8xf32> to vector<1x8x8xf32>
    %125 = vector.shape_cast %124 : vector<1x8x8xf32> to vector<8x8xf32>
    %cst_37 = arith.constant dense<0.000000e+00> : vector<8x512xf32>
    %126 = tpu.matmul %125, %123, %cst_37 {dimension_numbers = #tpu.dot_dimension_numbers<[1], [0], [0], [1], [0, 0, 1, 1], [], []>} : vector<8x8xf32>, vector<8x512xf32>, vector<8x512xf32> -> vector<8x512xf32>
    %127 = arith.addf %120, %126 : vector<8x512xf32>
    %c1_i32_38 = arith.constant 1 : i32
    %128 = tpu.dynamic_rotate %106 by %c1_i32_38 dim 1 : vector<8x512xf32>, i32 -> vector<8x512xf32>
    %129 = vector.broadcast %53 : vector<1x512xf32> to vector<8x512xf32>
    %130 = arith.mulf %128, %129 : vector<8x512xf32>
    %131 = vector.extract_strided_slice %107 {offsets = [3, 0, 0], sizes = [1, 8, 8], strides = [1, 1, 1]} : vector<9x8x8xf32> to vector<1x8x8xf32>
    %132 = vector.shape_cast %131 : vector<1x8x8xf32> to vector<8x8xf32>
    %cst_39 = arith.constant dense<0.000000e+00> : vector<8x512xf32>
    %133 = tpu.matmul %132, %130, %cst_39 {dimension_numbers = #tpu.dot_dimension_numbers<[1], [0], [0], [1], [0, 0, 1, 1], [], []>} : vector<8x8xf32>, vector<8x512xf32>, vector<8x512xf32> -> vector<8x512xf32>
    %134 = arith.addf %127, %133 : vector<8x512xf32>
    %135 = vector.extract_strided_slice %107 {offsets = [4, 0, 0], sizes = [1, 8, 8], strides = [1, 1, 1]} : vector<9x8x8xf32> to vector<1x8x8xf32>
    %136 = vector.shape_cast %135 : vector<1x8x8xf32> to vector<8x8xf32>
    %cst_40 = arith.constant dense<0.000000e+00> : vector<8x512xf32>
    %137 = tpu.matmul %136, %106, %cst_40 {dimension_numbers = #tpu.dot_dimension_numbers<[1], [0], [0], [1], [0, 0, 1, 1], [], []>} : vector<8x8xf32>, vector<8x512xf32>, vector<8x512xf32> -> vector<8x512xf32>
    %138 = arith.addf %134, %137 : vector<8x512xf32>
    %c511_i32 = arith.constant 511 : i32
    %139 = tpu.dynamic_rotate %106 by %c511_i32 dim 1 : vector<8x512xf32>, i32 -> vector<8x512xf32>
    %140 = vector.broadcast %66 : vector<1x512xf32> to vector<8x512xf32>
    %141 = arith.mulf %139, %140 : vector<8x512xf32>
    %142 = vector.extract_strided_slice %107 {offsets = [5, 0, 0], sizes = [1, 8, 8], strides = [1, 1, 1]} : vector<9x8x8xf32> to vector<1x8x8xf32>
    %143 = vector.shape_cast %142 : vector<1x8x8xf32> to vector<8x8xf32>
    %cst_41 = arith.constant dense<0.000000e+00> : vector<8x512xf32>
    %144 = tpu.matmul %143, %141, %cst_41 {dimension_numbers = #tpu.dot_dimension_numbers<[1], [0], [0], [1], [0, 0, 1, 1], [], []>} : vector<8x8xf32>, vector<8x512xf32>, vector<8x512xf32> -> vector<8x512xf32>
    %145 = arith.addf %138, %144 : vector<8x512xf32>
    %c497_i32 = arith.constant 497 : i32
    %146 = tpu.dynamic_rotate %106 by %c497_i32 dim 1 : vector<8x512xf32>, i32 -> vector<8x512xf32>
    %147 = vector.broadcast %79 : vector<1x512xf32> to vector<8x512xf32>
    %148 = arith.mulf %146, %147 : vector<8x512xf32>
    %149 = vector.extract_strided_slice %107 {offsets = [6, 0, 0], sizes = [1, 8, 8], strides = [1, 1, 1]} : vector<9x8x8xf32> to vector<1x8x8xf32>
    %150 = vector.shape_cast %149 : vector<1x8x8xf32> to vector<8x8xf32>
    %cst_42 = arith.constant dense<0.000000e+00> : vector<8x512xf32>
    %151 = tpu.matmul %150, %148, %cst_42 {dimension_numbers = #tpu.dot_dimension_numbers<[1], [0], [0], [1], [0, 0, 1, 1], [], []>} : vector<8x8xf32>, vector<8x512xf32>, vector<8x512xf32> -> vector<8x512xf32>
    %152 = arith.addf %145, %151 : vector<8x512xf32>
    %c496_i32 = arith.constant 496 : i32
    %153 = tpu.dynamic_rotate %106 by %c496_i32 dim 1 : vector<8x512xf32>, i32 -> vector<8x512xf32>
    %154 = vector.broadcast %92 : vector<1x512xf32> to vector<8x512xf32>
    %155 = arith.mulf %153, %154 : vector<8x512xf32>
    %156 = vector.extract_strided_slice %107 {offsets = [7, 0, 0], sizes = [1, 8, 8], strides = [1, 1, 1]} : vector<9x8x8xf32> to vector<1x8x8xf32>
    %157 = vector.shape_cast %156 : vector<1x8x8xf32> to vector<8x8xf32>
    %cst_43 = arith.constant dense<0.000000e+00> : vector<8x512xf32>
    %158 = tpu.matmul %157, %155, %cst_43 {dimension_numbers = #tpu.dot_dimension_numbers<[1], [0], [0], [1], [0, 0, 1, 1], [], []>} : vector<8x8xf32>, vector<8x512xf32>, vector<8x512xf32> -> vector<8x512xf32>
    %159 = arith.addf %152, %158 : vector<8x512xf32>
    %c495_i32 = arith.constant 495 : i32
    %160 = tpu.dynamic_rotate %106 by %c495_i32 dim 1 : vector<8x512xf32>, i32 -> vector<8x512xf32>
    %161 = vector.broadcast %105 : vector<1x512xf32> to vector<8x512xf32>
    %162 = arith.mulf %160, %161 : vector<8x512xf32>
    %163 = vector.extract_strided_slice %107 {offsets = [8, 0, 0], sizes = [1, 8, 8], strides = [1, 1, 1]} : vector<9x8x8xf32> to vector<1x8x8xf32>
    %164 = vector.shape_cast %163 : vector<1x8x8xf32> to vector<8x8xf32>
    %cst_44 = arith.constant dense<0.000000e+00> : vector<8x512xf32>
    %165 = tpu.matmul %164, %162, %cst_44 {dimension_numbers = #tpu.dot_dimension_numbers<[1], [0], [0], [1], [0, 0, 1, 1], [], []>} : vector<8x8xf32>, vector<8x512xf32>, vector<8x512xf32> -> vector<8x512xf32>
    %166 = arith.addf %159, %165 : vector<8x512xf32>
    %c0_45 = arith.constant 0 : index
    %c0_46 = arith.constant 0 : index
    %167 = vector.load %arg3[%c0_45, %c0_46] : memref<8x512xf32, #tpu.memory_space<vmem>>, vector<8x512xf32>
    tpu.vector_store %arg3[%c0_45, %c0_46], %166 {strides = array<i32>} : memref<8x512xf32, #tpu.memory_space<vmem>>, vector<8x512xf32>,
    return
  }
}

</mosaic_0001>

<llo_original>
// kernel: tpu_custom_call.1
$region0: #{tpu_custom_call.1}
  #allocation0 [shape = 'u32[]', space=smem, size = 0x4, offset = 0x4, fixed_abs, tag = 'smem constant byte address 0x4 - core index']
  #allocation1 [shape = 'u32[144,128]{1,0:T(1,128)}', space=vmem, size = 0x12000, scoped, tag = 'internal scratch']
  %s0 = inlined_call_operand.vmem [shape: f32[8,512], index: 0, kind: input, shape index: {}]
  %s1 = inlined_call_operand.vmem [shape: f32[9,8,8], index: 1, kind: input, shape index: {}]
  %s2 = inlined_call_operand.vmem [shape: s32[2,512], index: 2, kind: input, shape index: {}]
  %s3 = inlined_call_operand.hbm [shape: f32[8,512], index: 3, kind: output, shape index: {}]
  %s4 = sld [smem:[#allocation0]]
  $region22: #{tpu_custom_call.1} parent=0
    _
  %s6 = ssub.s32 1, %s4
  %s7 = scalar_select 0, %s6, %s4
  $region1: #{tpu_custom_call.1} parent=0
    #allocation2 [shape = 'u8[16384]{0}', space=vmem, size = 0x4000, scoped, tag = 'output window, operand 0, single buffered']
    #allocation3 [shape = 's32[1]{0}', space=sflag, size = 0x4, scoped, tag = 'scoped memory for tpu_custom_call.1']
    %8 = vsyncpa [#allocation3], 0
    // Predicated region
    $region2: #{tpu_custom_call.1} parent=1 // pred_check
      _
    $region3: #{tpu_custom_call.1} parent=1 // pred_check_branch
      %10 = sbr.rel (0) target = $region5
    $region4: #{tpu_custom_call.1} parent=1 // pred_region
      _
    $region5: #{tpu_custom_call.1} parent=1 // pred_fallthru
      _
    // Predicated region
    $region6: #{tpu_custom_call.1} parent=1 // pred_check
      _
    $region7: #{tpu_custom_call.1} parent=1 // pred_check_branch
      %12 = sbr.rel (0) target = $region9
    $region8: #{tpu_custom_call.1} parent=1 // pred_region
      _
    $region9: #{tpu_custom_call.1} parent=1 // pred_fallthru
      _
    // Predicated region
    $region10: #{tpu_custom_call.1} parent=1 // pred_check
      _
    $region11: #{tpu_custom_call.1} parent=1 // pred_check_branch
      %14 = sbr.rel (0) target = $region13
    $region12: #{tpu_custom_call.1} parent=1 // pred_region
      _
    $region13: #{tpu_custom_call.1} parent=1 // pred_fallthru
      _
    %v15 = vld [vmem:[%s2] ss:$2 sm:$0xf]
    %s16 = scalar_lea.vmem %s2, 1
    %v17 = vld [vmem:[%s16] ss:$2 sm:$0xf]
    %vm18 = vcmp.ge.s32.totalorder %v15, 1
    %vm19 = vcmp.lt.s32.totalorder %v15, 17
    %vm20 = vmand %vm18, %vm19
    %vm21 = vcmp.ge.s32.totalorder %v17, 1
    %vm22 = vmand %vm20, %vm21
    %vm23 = vcmp.lt.s32.totalorder %v17, 17
    %vm24 = vmand %vm22, %vm23
    %v25 = vsel %vm24, 1, 0
    %v26 = vcvt.s32.f32 %v25
    %vm27 = vcmp.ge.s32.totalorder %v17, 0
    %vm28 = vmand %vm20, %vm27
    %vm29 = vcmp.lt.s32.totalorder %v17, 16
    %vm30 = vmand %vm28, %vm29
    %v31 = vsel %vm30, 1, 0
    %v32 = vcvt.s32.f32 %v31
    %vm33 = vcmp.ge.s32.totalorder %v17, 4294967295
    %vm34 = vmand %vm20, %vm33
    %vm35 = vcmp.lt.s32.totalorder %v17, 15
    %vm36 = vmand %vm34, %vm35
    %v37 = vsel %vm36, 1, 0
    %v38 = vcvt.s32.f32 %v37
    %vm39 = vcmp.ge.s32.totalorder %v15, 0
    %vm40 = vcmp.lt.s32.totalorder %v15, 16
    %vm41 = vmand %vm39, %vm40
    %vm42 = vmand %vm41, %vm21
    %vm43 = vmand %vm42, %vm23
    %v44 = vsel %vm43, 1, 0
    %v45 = vcvt.s32.f32 %v44
    %vm46 = vmand %vm41, %vm33
    %vm47 = vmand %vm46, %vm35
    %v48 = vsel %vm47, 1, 0
    %v49 = vcvt.s32.f32 %v48
    %vm50 = vcmp.ge.s32.totalorder %v15, 4294967295
    %vm51 = vcmp.lt.s32.totalorder %v15, 15
    %vm52 = vmand %vm50, %vm51
    %vm53 = vmand %vm52, %vm21
    %vm54 = vmand %vm53, %vm23
    %v55 = vsel %vm54, 1, 0
    %v56 = vcvt.s32.f32 %v55
    %vm57 = vmand %vm52, %vm27
    %vm58 = vmand %vm57, %vm29
    %v59 = vsel %vm58, 1, 0
    %v60 = vcvt.s32.f32 %v59
    %vm61 = vmand %vm52, %vm33
    %vm62 = vmand %vm61, %vm35
    %v63 = vsel %vm62, 1, 0
    %v64 = vcvt.s32.f32 %v63
    %v65 = vld [vmem:[%s0] sm:$0xff]
    %v66 = vld [vmem:[%s0 + $0x8] sm:$0xff]
    %v67 = vld [vmem:[%s0 + $0x10] sm:$0xff]
    %v68 = vld [vmem:[%s0 + $0x18] sm:$0xff]
    %v69 = vld [vmem:[%s1] sm:$0xff]
    %v70 = vld [vmem:[%s1 + $0x8] sm:$0xff]
    %v71 = vld [vmem:[%s1 + $0x10] sm:$0xff]
    %v72 = vld [vmem:[%s1 + $0x18] sm:$0xff]
    %v73 = vld [vmem:[%s1 + $0x20] sm:$0xff]
    %v74 = vld [vmem:[%s1 + $0x28] sm:$0xff]
    %v75 = vld [vmem:[%s1 + $0x30] sm:$0xff]
    %v76 = vld [vmem:[%s1 + $0x38] sm:$0xff]
    %v77 = vld [vmem:[%s1 + $0x40] sm:$0xff]
    %78 = vrot.lane.b32.xlu0 %v65, 17
    %v79 = vpop.permute.xlu0 %78
    %80 = vrot.lane.b32.xlu0 %v66, 17
    %v81 = vpop.permute.xlu0 %80
    %82 = vrot.lane.b32.xlu0 %v67, 17
    %v83 = vpop.permute.xlu0 %82
    %84 = vrot.lane.b32.xlu0 %v68, 17
    %v85 = vpop.permute.xlu0 %84
    %v86 = vlaneseq
    %v87 = vand.u32 %v86, 127
    %vm88 = vcmp.lt.s32.totalorder %v87, 17
    %v89 = vsel %vm88, %v83, %v85
    %v90 = vsel %vm88, %v81, %v83
    %v91 = vsel %vm88, %v79, %v81
    %v92 = vsel %vm88, %v85, %v79
    %v94 = vlaneseq
    %v95 = vshrl.u32 %v94, 7
    %v96 = vsub.s32 0, %v95
    %v97 = vrot.slane %v26, %v96
    %v98 = vlaneseq
    %v99 = vshrl.u32 %v98, 7
    %v100 = vsub.s32 1, %v99
    %v101 = vrot.slane %v26, %v100
    %v102 = vlaneseq
    %v103 = vshrl.u32 %v102, 7
    %v104 = vsub.s32 2, %v103
    %v105 = vrot.slane %v26, %v104
    %v106 = vlaneseq
    %v107 = vshrl.u32 %v106, 7
    %v108 = vsub.s32 3, %v107
    %v109 = vrot.slane %v26, %v108
    %v114 = vmul.f32 %v92, %v97
    %v115 = vmul.f32 %v91, %v101
    %v116 = vmul.f32 %v90, %v105
    %v117 = vmul.f32 %v89, %v109
    %118 = vrot.lane.b32.xlu0 %v65, 16
    %v119 = vpop.permute.xlu0 %118
    %120 = vrot.lane.b32.xlu0 %v66, 16
    %v121 = vpop.permute.xlu0 %120
    %122 = vrot.lane.b32.xlu0 %v67, 16
    %v123 = vpop.permute.xlu0 %122
    %124 = vrot.lane.b32.xlu0 %v68, 16
    %v125 = vpop.permute.xlu0 %124
    %vm126 = vcmp.lt.s32.totalorder %v87, 16
    %v127 = vsel %vm126, %v123, %v125
    %v128 = vsel %vm126, %v121, %v123
    %v129 = vsel %vm126, %v119, %v121
    %v130 = vsel %vm126, %v125, %v119
    %v132 = vlaneseq
    %v133 = vshrl.u32 %v132, 7
    %v134 = vsub.s32 0, %v133
    %v135 = vrot.slane %v32, %v134
    %v136 = vlaneseq
    %v137 = vshrl.u32 %v136, 7
    %v138 = vsub.s32 1, %v137
    %v139 = vrot.slane %v32, %v138
    %v140 = vlaneseq
    %v141 = vshrl.u32 %v140, 7
    %v142 = vsub.s32 2, %v141
    %v143 = vrot.slane %v32, %v142
    %v144 = vlaneseq
    %v145 = vshrl.u32 %v144, 7
    %v146 = vsub.s32 3, %v145
    %v147 = vrot.slane %v32, %v146
    %v152 = vmul.f32 %v130, %v135
    %v153 = vmul.f32 %v129, %v139
    %v154 = vmul.f32 %v128, %v143
    %v155 = vmul.f32 %v127, %v147
    %vm156 = vcmask 64512
    %v158 = vsel %vm156, %v70, 0
    %160 = vmatprep.subr.mxu0 %v153
    %161 = vmatpush1.msra.mxu0 %v152
    %162 = vmatprep.subr.mxu0 0.0
    %163 = vmatpush1.msra.mxu0 0.0
    %164 = vmatprep.subr.mxu0 0.0
    %165 = vmatpush1.msra.mxu0 0.0
    %166 = vmatprep.subr.mxu0 0.0
    %167 = vmatpush1.msra.mxu0 0.0
    %168 = vmatprep.subr.mxu0 0.0
    %169 = vmatpush1.msra.mxu0 0.0
    %170 = vmatprep.subr.mxu0 0.0
    %171 = vmatpush1.msra.mxu0 0.0
    %172 = vmatprep.subr.mxu0 0.0
    %173 = vmatpush1.msra.mxu0 0.0
    %174 = vmatprep.subr.mxu0 0.0
    %175 = vmatpush1.msra.mxu0 0.0
    %176 = vmatprep.subr.mxu0 0.0
    %177 = vmatpush1.msra.mxu0 0.0
    %178 = vmatprep.subr.mxu0 0.0
    %179 = vmatpush1.msra.mxu0 0.0
    %180 = vmatprep.subr.mxu0 0.0
    %181 = vmatpush1.msra.mxu0 0.0
    %182 = vmatprep.subr.mxu0 0.0
    %183 = vmatpush1.msra.mxu0 0.0
    %184 = vmatprep.subr.mxu0 0.0
    %185 = vmatpush1.msra.mxu0 0.0
    %186 = vmatprep.subr.mxu0 0.0
    %187 = vmatpush1.msra.mxu0 0.0
    %188 = vmatprep.subr.mxu0 0.0
    %189 = vmatpush1.msra.mxu0 0.0
    %190 = vmatprep.subr.mxu0 0.0
    %191 = vmatpush1.msra.mxu0 0.0
    %192 = vmatprep.subr.mxu0 0.0
    %193 = vmatpush1.msra.mxu0 0.0
    %194 = vmatprep.subr.mxu0 0.0
    %195 = vmatpush1.msra.mxu0 0.0
    %196 = vmatprep.subr.mxu0 0.0
    %197 = vmatpush1.msra.mxu0 0.0
    %198 = vmatprep.subr.mxu0 0.0
    %199 = vmatpush1.msra.mxu0 0.0
    %200 = vmatprep.subr.mxu0 0.0
    %201 = vmatpush1.msra.mxu0 0.0
    %202 = vmatprep.subr.mxu0 0.0
    %203 = vmatpush1.msra.mxu0 0.0
    %204 = vmatprep.subr.mxu0 0.0
    %205 = vmatpush1.msra.mxu0 0.0
    %206 = vmatprep.subr.mxu0 0.0
    %207 = vmatpush1.msra.mxu0 0.0
    %208 = vmatprep.subr.mxu0 0.0
    %209 = vmatpush1.msra.mxu0 0.0
    %210 = vmatprep.subr.mxu0 0.0
    %211 = vmatpush1.msra.mxu0 0.0
    %212 = vmatprep.subr.mxu0 0.0
    %213 = vmatpush1.msra.mxu0 0.0
    %214 = vmatprep.subr.mxu0 0.0
    %215 = vmatpush1.msra.mxu0 0.0
    %216 = vmatprep.subr.mxu0 0.0
    %217 = vmatpush1.msra.mxu0 0.0
    %218 = vmatprep.subr.mxu0 0.0
    %219 = vmatpush1.msra.mxu0 0.0
    %220 = vmatprep.subr.mxu0 0.0
    %221 = vmatpush1.msra.mxu0 0.0
    %222 = vmatprep.subr.mxu0 0.0
    %223 = vmatpush1.msra.mxu0 0.0
    %224 = vmatprep.mubr.f32.mxu0 0.0
    %225 = vmatmul.mubr.f32.gmra.mrb[0].mxu0 %v158
    %v226 = vpop.f32.mrb[0].mxu0
    %v227 = vadd.f32 0.0, %v226
    %v228 = vpop.f32.mrb[0].mxu0
    %v229 = vadd.f32 0.0, %v228
    %230 = vdwg.mxu0
    %231 = vmatprep.subr.mxu0 %v155
    %232 = vmatpush1.msra.mxu0 %v154
    %233 = vmatprep.subr.mxu0 0.0
    %234 = vmatpush1.msra.mxu0 0.0
    %235 = vmatprep.subr.mxu0 0.0
    %236 = vmatpush1.msra.mxu0 0.0
    %237 = vmatprep.subr.mxu0 0.0
    %238 = vmatpush1.msra.mxu0 0.0
    %239 = vmatprep.subr.mxu0 0.0
    %240 = vmatpush1.msra.mxu0 0.0
    %241 = vmatprep.subr.mxu0 0.0
    %242 = vmatpush1.msra.mxu0 0.0
    %243 = vmatprep.subr.mxu0 0.0
    %244 = vmatpush1.msra.mxu0 0.0
    %245 = vmatprep.subr.mxu0 0.0
    %246 = vmatpush1.msra.mxu0 0.0
    %247 = vmatprep.subr.mxu0 0.0
    %248 = vmatpush1.msra.mxu0 0.0
    %249 = vmatprep.subr.mxu0 0.0
    %250 = vmatpush1.msra.mxu0 0.0
    %251 = vmatprep.subr.mxu0 0.0
    %252 = vmatpush1.msra.mxu0 0.0
    %253 = vmatprep.subr.mxu0 0.0
    %254 = vmatpush1.msra.mxu0 0.0
    %255 = vmatprep.subr.mxu0 0.0
    %256 = vmatpush1.msra.mxu0 0.0
    %257 = vmatprep.subr.mxu0 0.0
    %258 = vmatpush1.msra.mxu0 0.0
    %259 = vmatprep.subr.mxu0 0.0
    %260 = vmatpush1.msra.mxu0 0.0
    %261 = vmatprep.subr.mxu0 0.0
    %262 = vmatpush1.msra.mxu0 0.0
    %263 = vmatprep.subr.mxu0 0.0
    %264 = vmatpush1.msra.mxu0 0.0
    %265 = vmatprep.subr.mxu0 0.0
    %266 = vmatpush1.msra.mxu0 0.0
    %267 = vmatprep.subr.mxu0 0.0
    %268 = vmatpush1.msra.mxu0 0.0
    %269 = vmatprep.subr.mxu0 0.0
    %270 = vmatpush1.msra.mxu0 0.0
    %271 = vmatprep.subr.mxu0 0.0
    %272 = vmatpush1.msra.mxu0 0.0
    %273 = vmatprep.subr.mxu0 0.0
    %274 = vmatpush1.msra.mxu0 0.0
    %275 = vmatprep.subr.mxu0 0.0
    %276 = vmatpush1.msra.mxu0 0.0
    %277 = vmatprep.subr.mxu0 0.0
    %278 = vmatpush1.msra.mxu0 0.0
    %279 = vmatprep.subr.mxu0 0.0
    %280 = vmatpush1.msra.mxu0 0.0
    %281 = vmatprep.subr.mxu0 0.0
    %282 = vmatpush1.msra.mxu0 0.0
    %283 = vmatprep.subr.mxu0 0.0
    %284 = vmatpush1.msra.mxu0 0.0
    %285 = vmatprep.subr.mxu0 0.0
    %286 = vmatpush1.msra.mxu0 0.0
    %287 = vmatprep.subr.mxu0 0.0
    %288 = vmatpush1.msra.mxu0 0.0
    %289 = vmatprep.subr.mxu0 0.0
    %290 = vmatpush1.msra.mxu0 0.0
    %291 = vmatprep.subr.mxu0 0.0
    %292 = vmatpush1.msra.mxu0 0.0
    %293 = vmatprep.subr.mxu0 0.0
    %294 = vmatpush1.msra.mxu0 0.0
    %295 = vmatprep.mubr.f32.mxu0 0.0
    %296 = vmatmul.mubr.f32.gmra.mrb[0].mxu0 %v158
    %v297 = vpop.f32.mrb[0].mxu0
    %v298 = vadd.f32 0.0, %v297
    %v299 = vpop.f32.mrb[0].mxu0
    %v300 = vadd.f32 0.0, %v299
    %301 = vdwg.mxu0
    %v303 = vsel %vm156, %v69, 0
    %305 = vmatprep.subr.mxu0 %v115
    %306 = vmatpush1.msra.mxu0 %v114
    %307 = vmatprep.subr.mxu0 0.0
    %308 = vmatpush1.msra.mxu0 0.0
    %309 = vmatprep.subr.mxu0 0.0
    %310 = vmatpush1.msra.mxu0 0.0
    %311 = vmatprep.subr.mxu0 0.0
    %312 = vmatpush1.msra.mxu0 0.0
    %313 = vmatprep.subr.mxu0 0.0
    %314 = vmatpush1.msra.mxu0 0.0
    %315 = vmatprep.subr.mxu0 0.0
    %316 = vmatpush1.msra.mxu0 0.0
    %317 = vmatprep.subr.mxu0 0.0
    %318 = vmatpush1.msra.mxu0 0.0
    %319 = vmatprep.subr.mxu0 0.0
    %320 = vmatpush1.msra.mxu0 0.0
    %321 = vmatprep.subr.mxu0 0.0
    %322 = vmatpush1.msra.mxu0 0.0
    %323 = vmatprep.subr.mxu0 0.0
    %324 = vmatpush1.msra.mxu0 0.0
    %325 = vmatprep.subr.mxu0 0.0
    %326 = vmatpush1.msra.mxu0 0.0
    %327 = vmatprep.subr.mxu0 0.0
    %328 = vmatpush1.msra.mxu0 0.0
    %329 = vmatprep.subr.mxu0 0.0
    %330 = vmatpush1.msra.mxu0 0.0
    %331 = vmatprep.subr.mxu0 0.0
    %332 = vmatpush1.msra.mxu0 0.0
    %333 = vmatprep.subr.mxu0 0.0
    %334 = vmatpush1.msra.mxu0 0.0
    %335 = vmatprep.subr.mxu0 0.0
    %336 = vmatpush1.msra.mxu0 0.0
    %337 = vmatprep.subr.mxu0 0.0
    %338 = vmatpush1.msra.mxu0 0.0
    %339 = vmatprep.subr.mxu0 0.0
    %340 = vmatpush1.msra.mxu0 0.0
    %341 = vmatprep.subr.mxu0 0.0
    %342 = vmatpush1.msra.mxu0 0.0
    %343 = vmatprep.subr.mxu0 0.0
    %344 = vmatpush1.msra.mxu0 0.0
    %345 = vmatprep.subr.mxu0 0.0
    %346 = vmatpush1.msra.mxu0 0.0
    %347 = vmatprep.subr.mxu0 0.0
    %348 = vmatpush1.msra.mxu0 0.0
    %349 = vmatprep.subr.mxu0 0.0
    %350 = vmatpush1.msra.mxu0 0.0
    %351 = vmatprep.subr.mxu0 0.0
    %352 = vmatpush1.msra.mxu0 0.0
    %353 = vmatprep.subr.mxu0 0.0
    %354 = vmatpush1.msra.mxu0 0.0
    %355 = vmatprep.subr.mxu0 0.0
    %356 = vmatpush1.msra.mxu0 0.0
    %357 = vmatprep.subr.mxu0 0.0
    %358 = vmatpush1.msra.mxu0 0.0
    %359 = vmatprep.subr.mxu0 0.0
    %360 = vmatpush1.msra.mxu0 0.0
    %361 = vmatprep.subr.mxu0 0.0
    %362 = vmatpush1.msra.mxu0 0.0
    %363 = vmatprep.subr.mxu0 0.0
    %364 = vmatpush1.msra.mxu0 0.0
    %365 = vmatprep.subr.mxu0 0.0
    %366 = vmatpush1.msra.mxu0 0.0
    %367 = vmatprep.subr.mxu0 0.0
    %368 = vmatpush1.msra.mxu0 0.0
    %369 = vmatprep.mubr.f32.mxu0 0.0
    %370 = vmatmul.mubr.f32.gmra.mrb[0].mxu0 %v303
    %v371 = vpop.f32.mrb[0].mxu0
    %v372 = vadd.f32 %v227, %v371
    %v373 = vpop.f32.mrb[0].mxu0
    %v374 = vadd.f32 %v229, %v373
    %375 = vdwg.mxu0
    %376 = vmatprep.subr.mxu0 %v117
    %377 = vmatpush1.msra.mxu0 %v116
    %378 = vmatprep.subr.mxu0 0.0
    %379 = vmatpush1.msra.mxu0 0.0
    %380 = vmatprep.subr.mxu0 0.0
    %381 = vmatpush1.msra.mxu0 0.0
    %382 = vmatprep.subr.mxu0 0.0
    %383 = vmatpush1.msra.mxu0 0.0
    %384 = vmatprep.subr.mxu0 0.0
    %385 = vmatpush1.msra.mxu0 0.0
    %386 = vmatprep.subr.mxu0 0.0
    %387 = vmatpush1.msra.mxu0 0.0
    %388 = vmatprep.subr.mxu0 0.0
    %389 = vmatpush1.msra.mxu0 0.0
    %390 = vmatprep.subr.mxu0 0.0
    %391 = vmatpush1.msra.mxu0 0.0
    %392 = vmatprep.subr.mxu0 0.0
    %393 = vmatpush1.msra.mxu0 0.0
    %394 = vmatprep.subr.mxu0 0.0
    %395 = vmatpush1.msra.mxu0 0.0
    %396 = vmatprep.subr.mxu0 0.0
    %397 = vmatpush1.msra.mxu0 0.0
    %398 = vmatprep.subr.mxu0 0.0
    %399 = vmatpush1.msra.mxu0 0.0
    %400 = vmatprep.subr.mxu0 0.0
    %401 = vmatpush1.msra.mxu0 0.0
    %402 = vmatprep.subr.mxu0 0.0
    %403 = vmatpush1.msra.mxu0 0.0
    %404 = vmatprep.subr.mxu0 0.0
    %405 = vmatpush1.msra.mxu0 0.0
    %406 = vmatprep.subr.mxu0 0.0
    %407 = vmatpush1.msra.mxu0 0.0
    %408 = vmatprep.subr.mxu0 0.0
    %409 = vmatpush1.msra.mxu0 0.0
    %410 = vmatprep.subr.mxu0 0.0
    %411 = vmatpush1.msra.mxu0 0.0
    %412 = vmatprep.subr.mxu0 0.0
    %413 = vmatpush1.msra.mxu0 0.0
    %414 = vmatprep.subr.mxu0 0.0
    %415 = vmatpush1.msra.mxu0 0.0
    %416 = vmatprep.subr.mxu0 0.0
    %417 = vmatpush1.msra.mxu0 0.0
    %418 = vmatprep.subr.mxu0 0.0
    %419 = vmatpush1.msra.mxu0 0.0
    %420 = vmatprep.subr.mxu0 0.0
    %421 = vmatpush1.msra.mxu0 0.0
    %422 = vmatprep.subr.mxu0 0.0
    %423 = vmatpush1.msra.mxu0 0.0
    %424 = vmatprep.subr.mxu0 0.0
    %425 = vmatpush1.msra.mxu0 0.0
    %426 = vmatprep.subr.mxu0 0.0
    %427 = vmatpush1.msra.mxu0 0.0
    %428 = vmatprep.subr.mxu0 0.0
    %429 = vmatpush1.msra.mxu0 0.0
    %430 = vmatprep.subr.mxu0 0.0
    %431 = vmatpush1.msra.mxu0 0.0
    %432 = vmatprep.subr.mxu0 0.0
    %433 = vmatpush1.msra.mxu0 0.0
    %434 = vmatprep.subr.mxu0 0.0
    %435 = vmatpush1.msra.mxu0 0.0
    %436 = vmatprep.subr.mxu0 0.0
    %437 = vmatpush1.msra.mxu0 0.0
    %438 = vmatprep.subr.mxu0 0.0
    %439 = vmatpush1.msra.mxu0 0.0
    %440 = vmatprep.mubr.f32.mxu0 0.0
    %441 = vmatmul.mubr.f32.gmra.mrb[0].mxu0 %v303
    %v442 = vpop.f32.mrb[0].mxu0
    %v443 = vadd.f32 %v298, %v442
    %v444 = vpop.f32.mrb[0].mxu0
    %v445 = vadd.f32 %v300, %v444
    %446 = vdwg.mxu0
    %447 = vrot.lane.b32.xlu0 %v65, 15
    %v448 = vpop.permute.xlu0 %447
    %449 = vrot.lane.b32.xlu0 %v66, 15
    %v450 = vpop.permute.xlu0 %449
    %451 = vrot.lane.b32.xlu0 %v67, 15
    %v452 = vpop.permute.xlu0 %451
    %453 = vrot.lane.b32.xlu0 %v68, 15
    %v454 = vpop.permute.xlu0 %453
    %vm455 = vcmp.lt.s32.totalorder %v87, 15
    %v456 = vsel %vm455, %v452, %v454
    %v457 = vsel %vm455, %v450, %v452
    %v458 = vsel %vm455, %v448, %v450
    %v459 = vsel %vm455, %v454, %v448
    %v461 = vlaneseq
    %v462 = vshrl.u32 %v461, 7
    %v463 = vsub.s32 0, %v462
    %v464 = vrot.slane %v38, %v463
    %v465 = vlaneseq
    %v466 = vshrl.u32 %v465, 7
    %v467 = vsub.s32 1, %v466
    %v468 = vrot.slane %v38, %v467
    %v469 = vlaneseq
    %v470 = vshrl.u32 %v469, 7
    %v471 = vsub.s32 2, %v470
    %v472 = vrot.slane %v38, %v471
    %v473 = vlaneseq
    %v474 = vshrl.u32 %v473, 7
    %v475 = vsub.s32 3, %v474
    %v476 = vrot.slane %v38, %v475
    %v481 = vmul.f32 %v459, %v464
    %v482 = vmul.f32 %v458, %v468
    %v483 = vmul.f32 %v457, %v472
    %v484 = vmul.f32 %v456, %v476
    %v486 = vsel %vm156, %v71, 0
    %488 = vmatprep.subr.mxu0 %v482
    %489 = vmatpush1.msra.mxu0 %v481
    %490 = vmatprep.subr.mxu0 0.0
    %491 = vmatpush1.msra.mxu0 0.0
    %492 = vmatprep.subr.mxu0 0.0
    %493 = vmatpush1.msra.mxu0 0.0
    %494 = vmatprep.subr.mxu0 0.0
    %495 = vmatpush1.msra.mxu0 0.0
    %496 = vmatprep.subr.mxu0 0.0
    %497 = vmatpush1.msra.mxu0 0.0
    %498 = vmatprep.subr.mxu0 0.0
    %499 = vmatpush1.msra.mxu0 0.0
    %500 = vmatprep.subr.mxu0 0.0
    %501 = vmatpush1.msra.mxu0 0.0
    %502 = vmatprep.subr.mxu0 0.0
    %503 = vmatpush1.msra.mxu0 0.0
    %504 = vmatprep.subr.mxu0 0.0
    %505 = vmatpush1.msra.mxu0 0.0
    %506 = vmatprep.subr.mxu0 0.0
    %507 = vmatpush1.msra.mxu0 0.0
    %508 = vmatprep.subr.mxu0 0.0
    %509 = vmatpush1.msra.mxu0 0.0
    %510 = vmatprep.subr.mxu0 0.0
    %511 = vmatpush1.msra.mxu0 0.0
    %512 = vmatprep.subr.mxu0 0.0
    %513 = vmatpush1.msra.mxu0 0.0
    %514 = vmatprep.subr.mxu0 0.0
    %515 = vmatpush1.msra.mxu0 0.0
    %516 = vmatprep.subr.mxu0 0.0
    %517 = vmatpush1.msra.mxu0 0.0
    %518 = vmatprep.subr.mxu0 0.0
    %519 = vmatpush1.msra.mxu0 0.0
    %520 = vmatprep.subr.mxu0 0.0
    %521 = vmatpush1.msra.mxu0 0.0
    %522 = vmatprep.subr.mxu0 0.0
    %523 = vmatpush1.msra.mxu0 0.0
    %524 = vmatprep.subr.mxu0 0.0
    %525 = vmatpush1.msra.mxu0 0.0
    %526 = vmatprep.subr.mxu0 0.0
    %527 = vmatpush1.msra.mxu0 0.0
    %528 = vmatprep.subr.mxu0 0.0
    %529 = vmatpush1.msra.mxu0 0.0
    %530 = vmatprep.subr.mxu0 0.0
    %531 = vmatpush1.msra.mxu0 0.0
    %532 = vmatprep.subr.mxu0 0.0
    %533 = vmatpush1.msra.mxu0 0.0
    %534 = vmatprep.subr.mxu0 0.0
    %535 = vmatpush1.msra.mxu0 0.0
    %536 = vmatprep.subr.mxu0 0.0
    %537 = vmatpush1.msra.mxu0 0.0
    %538 = vmatprep.subr.mxu0 0.0
    %539 = vmatpush1.msra.mxu0 0.0
    %540 = vmatprep.subr.mxu0 0.0
    %541 = vmatpush1.msra.mxu0 0.0
    %542 = vmatprep.subr.mxu0 0.0
    %543 = vmatpush1.msra.mxu0 0.0
    %544 = vmatprep.subr.mxu0 0.0
    %545 = vmatpush1.msra.mxu0 0.0
    %546 = vmatprep.subr.mxu0 0.0
    %547 = vmatpush1.msra.mxu0 0.0
    %548 = vmatprep.subr.mxu0 0.0
    %549 = vmatpush1.msra.mxu0 0.0
    %550 = vmatprep.subr.mxu0 0.0
    %551 = vmatpush1.msra.mxu0 0.0
    %552 = vmatprep.mubr.f32.mxu0 0.0
    %553 = vmatmul.mubr.f32.gmra.mrb[0].mxu0 %v486
    %v554 = vpop.f32.mrb[0].mxu0
    %v555 = vadd.f32 0.0, %v554
    %v556 = vpop.f32.mrb[0].mxu0
    %v557 = vadd.f32 0.0, %v556
    %558 = vdwg.mxu0
    %559 = vmatprep.subr.mxu0 %v484
    %560 = vmatpush1.msra.mxu0 %v483
    %561 = vmatprep.subr.mxu0 0.0
    %562 = vmatpush1.msra.mxu0 0.0
    %563 = vmatprep.subr.mxu0 0.0
    %564 = vmatpush1.msra.mxu0 0.0
    %565 = vmatprep.subr.mxu0 0.0
    %566 = vmatpush1.msra.mxu0 0.0
    %567 = vmatprep.subr.mxu0 0.0
    %568 = vmatpush1.msra.mxu0 0.0
    %569 = vmatprep.subr.mxu0 0.0
    %570 = vmatpush1.msra.mxu0 0.0
    %571 = vmatprep.subr.mxu0 0.0
    %572 = vmatpush1.msra.mxu0 0.0
    %573 = vmatprep.subr.mxu0 0.0
    %574 = vmatpush1.msra.mxu0 0.0
    %575 = vmatprep.subr.mxu0 0.0
    %576 = vmatpush1.msra.mxu0 0.0
    %577 = vmatprep.subr.mxu0 0.0
    %578 = vmatpush1.msra.mxu0 0.0
    %579 = vmatprep.subr.mxu0 0.0
    %580 = vmatpush1.msra.mxu0 0.0
    %581 = vmatprep.subr.mxu0 0.0
    %582 = vmatpush1.msra.mxu0 0.0
    %583 = vmatprep.subr.mxu0 0.0
    %584 = vmatpush1.msra.mxu0 0.0
    %585 = vmatprep.subr.mxu0 0.0
    %586 = vmatpush1.msra.mxu0 0.0
    %587 = vmatprep.subr.mxu0 0.0
    %588 = vmatpush1.msra.mxu0 0.0
    %589 = vmatprep.subr.mxu0 0.0
    %590 = vmatpush1.msra.mxu0 0.0
    %591 = vmatprep.subr.mxu0 0.0
    %592 = vmatpush1.msra.mxu0 0.0
    %593 = vmatprep.subr.mxu0 0.0
    %594 = vmatpush1.msra.mxu0 0.0
    %595 = vmatprep.subr.mxu0 0.0
    %596 = vmatpush1.msra.mxu0 0.0
    %597 = vmatprep.subr.mxu0 0.0
    %598 = vmatpush1.msra.mxu0 0.0
    %599 = vmatprep.subr.mxu0 0.0
    %600 = vmatpush1.msra.mxu0 0.0
    %601 = vmatprep.subr.mxu0 0.0
    %602 = vmatpush1.msra.mxu0 0.0
    %603 = vmatprep.subr.mxu0 0.0
    %604 = vmatpush1.msra.mxu0 0.0
    %605 = vmatprep.subr.mxu0 0.0
    %606 = vmatpush1.msra.mxu0 0.0
    %607 = vmatprep.subr.mxu0 0.0
    %608 = vmatpush1.msra.mxu0 0.0
    %609 = vmatprep.subr.mxu0 0.0
    %610 = vmatpush1.msra.mxu0 0.0
    %611 = vmatprep.subr.mxu0 0.0
    %612 = vmatpush1.msra.mxu0 0.0
    %613 = vmatprep.subr.mxu0 0.0
    %614 = vmatpush1.msra.mxu0 0.0
    %615 = vmatprep.subr.mxu0 0.0
    %616 = vmatpush1.msra.mxu0 0.0
    %617 = vmatprep.subr.mxu0 0.0
    %618 = vmatpush1.msra.mxu0 0.0
    %619 = vmatprep.subr.mxu0 0.0
    %620 = vmatpush1.msra.mxu0 0.0
    %621 = vmatprep.subr.mxu0 0.0
    %622 = vmatpush1.msra.mxu0 0.0
    %623 = vmatprep.mubr.f32.mxu0 0.0
    %624 = vmatmul.mubr.f32.gmra.mrb[0].mxu0 %v486
    %v625 = vpop.f32.mrb[0].mxu0
    %v626 = vadd.f32 0.0, %v625
    %v627 = vpop.f32.mrb[0].mxu0
    %v628 = vadd.f32 0.0, %v627
    %629 = vdwg.mxu0
    %v630 = vadd.f32 %v372, %v555
    %v631 = vadd.f32 %v374, %v557
    %v632 = vadd.f32 %v443, %v626
    %v633 = vadd.f32 %v445, %v628
    %634 = vrot.lane.b32.xlu0 %v65, 1
    %v635 = vpop.permute.xlu0 %634
    %636 = vrot.lane.b32.xlu0 %v66, 1
    %v637 = vpop.permute.xlu0 %636
    %638 = vrot.lane.b32.xlu0 %v67, 1
    %v639 = vpop.permute.xlu0 %638
    %640 = vrot.lane.b32.xlu0 %v68, 1
    %v641 = vpop.permute.xlu0 %640
    %vm642 = vcmp.lt.s32.totalorder %v87, 1
    %v643 = vsel %vm642, %v639, %v641
    %v644 = vsel %vm642, %v637, %v639
    %v645 = vsel %vm642, %v635, %v637
    %v646 = vsel %vm642, %v641, %v635
    %v648 = vlaneseq
    %v649 = vshrl.u32 %v648, 7
    %v650 = vsub.s32 0, %v649
    %v651 = vrot.slane %v45, %v650
    %v652 = vlaneseq
    %v653 = vshrl.u32 %v652, 7
    %v654 = vsub.s32 1, %v653
    %v655 = vrot.slane %v45, %v654
    %v656 = vlaneseq
    %v657 = vshrl.u32 %v656, 7
    %v658 = vsub.s32 2, %v657
    %v659 = vrot.slane %v45, %v658
    %v660 = vlaneseq
    %v661 = vshrl.u32 %v660, 7
    %v662 = vsub.s32 3, %v661
    %v663 = vrot.slane %v45, %v662
    %v668 = vmul.f32 %v646, %v651
    %v669 = vmul.f32 %v645, %v655
    %v670 = vmul.f32 %v644, %v659
    %v671 = vmul.f32 %v643, %v663
    %v673 = vsel %vm156, %v72, 0
    %675 = vmatprep.subr.mxu0 %v669
    %676 = vmatpush1.msra.mxu0 %v668
    %677 = vmatprep.subr.mxu0 0.0
    %678 = vmatpush1.msra.mxu0 0.0
    %679 = vmatprep.subr.mxu0 0.0
    %680 = vmatpush1.msra.mxu0 0.0
    %681 = vmatprep.subr.mxu0 0.0
    %682 = vmatpush1.msra.mxu0 0.0
    %683 = vmatprep.subr.mxu0 0.0
    %684 = vmatpush1.msra.mxu0 0.0
    %685 = vmatprep.subr.mxu0 0.0
    %686 = vmatpush1.msra.mxu0 0.0
    %687 = vmatprep.subr.mxu0 0.0
    %688 = vmatpush1.msra.mxu0 0.0
    %689 = vmatprep.subr.mxu0 0.0
    %690 = vmatpush1.msra.mxu0 0.0
    %691 = vmatprep.subr.mxu0 0.0
    %692 = vmatpush1.msra.mxu0 0.0
    %693 = vmatprep.subr.mxu0 0.0
    %694 = vmatpush1.msra.mxu0 0.0
    %695 = vmatprep.subr.mxu0 0.0
    %696 = vmatpush1.msra.mxu0 0.0
    %697 = vmatprep.subr.mxu0 0.0
    %698 = vmatpush1.msra.mxu0 0.0
    %699 = vmatprep.subr.mxu0 0.0
    %700 = vmatpush1.msra.mxu0 0.0
    %701 = vmatprep.subr.mxu0 0.0
    %702 = vmatpush1.msra.mxu0 0.0
    %703 = vmatprep.subr.mxu0 0.0
    %704 = vmatpush1.msra.mxu0 0.0
    %705 = vmatprep.subr.mxu0 0.0
    %706 = vmatpush1.msra.mxu0 0.0
    %707 = vmatprep.subr.mxu0 0.0
    %708 = vmatpush1.msra.mxu0 0.0
    %709 = vmatprep.subr.mxu0 0.0
    %710 = vmatpush1.msra.mxu0 0.0
    %711 = vmatprep.subr.mxu0 0.0
    %712 = vmatpush1.msra.mxu0 0.0
    %713 = vmatprep.subr.mxu0 0.0
    %714 = vmatpush1.msra.mxu0 0.0
    %715 = vmatprep.subr.mxu0 0.0
    %716 = vmatpush1.msra.mxu0 0.0
    %717 = vmatprep.subr.mxu0 0.0
    %718 = vmatpush1.msra.mxu0 0.0
    %719 = vmatprep.subr.mxu0 0.0
    %720 = vmatpush1.msra.mxu0 0.0
    %721 = vmatprep.subr.mxu0 0.0
    %722 = vmatpush1.msra.mxu0 0.0
    %723 = vmatprep.subr.mxu0 0.0
    %724 = vmatpush1.msra.mxu0 0.0
    %725 = vmatprep.subr.mxu0 0.0
    %726 = vmatpush1.msra.mxu0 0.0
    %727 = vmatprep.subr.mxu0 0.0
    %728 = vmatpush1.msra.mxu0 0.0
    %729 = vmatprep.subr.mxu0 0.0
    %730 = vmatpush1.msra.mxu0 0.0
    %731 = vmatprep.subr.mxu0 0.0
    %732 = vmatpush1.msra.mxu0 0.0
    %733 = vmatprep.subr.mxu0 0.0
    %734 = vmatpush1.msra.mxu0 0.0
    %735 = vmatprep.subr.mxu0 0.0
    %736 = vmatpush1.msra.mxu0 0.0
    %737 = vmatprep.subr.mxu0 0.0
    %738 = vmatpush1.msra.mxu0 0.0
    %739 = vmatprep.mubr.f32.mxu0 0.0
    %740 = vmatmul.mubr.f32.gmra.mrb[0].mxu0 %v673
    %v741 = vpop.f32.mrb[0].mxu0
    %v742 = vadd.f32 0.0, %v741
    %v743 = vpop.f32.mrb[0].mxu0
    %v744 = vadd.f32 0.0, %v743
    %745 = vdwg.mxu0
    %746 = vmatprep.subr.mxu0 %v671
    %747 = vmatpush1.msra.mxu0 %v670
    %748 = vmatprep.subr.mxu0 0.0
    %749 = vmatpush1.msra.mxu0 0.0
    %750 = vmatprep.subr.mxu0 0.0
    %751 = vmatpush1.msra.mxu0 0.0
    %752 = vmatprep.subr.mxu0 0.0
    %753 = vmatpush1.msra.mxu0 0.0
    %754 = vmatprep.subr.mxu0 0.0
    %755 = vmatpush1.msra.mxu0 0.0
    %756 = vmatprep.subr.mxu0 0.0
    %757 = vmatpush1.msra.mxu0 0.0
    %758 = vmatprep.subr.mxu0 0.0
    %759 = vmatpush1.msra.mxu0 0.0
    %760 = vmatprep.subr.mxu0 0.0
    %761 = vmatpush1.msra.mxu0 0.0
    %762 = vmatprep.subr.mxu0 0.0
    %763 = vmatpush1.msra.mxu0 0.0
    %764 = vmatprep.subr.mxu0 0.0
    %765 = vmatpush1.msra.mxu0 0.0
    %766 = vmatprep.subr.mxu0 0.0
    %767 = vmatpush1.msra.mxu0 0.0
    %768 = vmatprep.subr.mxu0 0.0
    %769 = vmatpush1.msra.mxu0 0.0
    %770 = vmatprep.subr.mxu0 0.0
    %771 = vmatpush1.msra.mxu0 0.0
    %772 = vmatprep.subr.mxu0 0.0
    %773 = vmatpush1.msra.mxu0 0.0
    %774 = vmatprep.subr.mxu0 0.0
    %775 = vmatpush1.msra.mxu0 0.0
    %776 = vmatprep.subr.mxu0 0.0
    %777 = vmatpush1.msra.mxu0 0.0
    %778 = vmatprep.subr.mxu0 0.0
    %779 = vmatpush1.msra.mxu0 0.0
    %780 = vmatprep.subr.mxu0 0.0
    %781 = vmatpush1.msra.mxu0 0.0
    %782 = vmatprep.subr.mxu0 0.0
    %783 = vmatpush1.msra.mxu0 0.0
    %784 = vmatprep.subr.mxu0 0.0
    %785 = vmatpush1.msra.mxu0 0.0
    %786 = vmatprep.subr.mxu0 0.0
    %787 = vmatpush1.msra.mxu0 0.0
    %788 = vmatprep.subr.mxu0 0.0
    %789 = vmatpush1.msra.mxu0 0.0
    %790 = vmatprep.subr.mxu0 0.0
    %791 = vmatpush1.msra.mxu0 0.0
    %792 = vmatprep.subr.mxu0 0.0
    %793 = vmatpush1.msra.mxu0 0.0
    %794 = vmatprep.subr.mxu0 0.0
    %795 = vmatpush1.msra.mxu0 0.0
    %796 = vmatprep.subr.mxu0 0.0
    %797 = vmatpush1.msra.mxu0 0.0
    %798 = vmatprep.subr.mxu0 0.0
    %799 = vmatpush1.msra.mxu0 0.0
    %800 = vmatprep.subr.mxu0 0.0
    %801 = vmatpush1.msra.mxu0 0.0
    %802 = vmatprep.subr.mxu0 0.0
    %803 = vmatpush1.msra.mxu0 0.0
    %804 = vmatprep.subr.mxu0 0.0
    %805 = vmatpush1.msra.mxu0 0.0
    %806 = vmatprep.subr.mxu0 0.0
    %807 = vmatpush1.msra.mxu0 0.0
    %808 = vmatprep.subr.mxu0 0.0
    %809 = vmatpush1.msra.mxu0 0.0
    %810 = vmatprep.mubr.f32.mxu0 0.0
    %811 = vmatmul.mubr.f32.gmra.mrb[0].mxu0 %v673
    %v812 = vpop.f32.mrb[0].mxu0
    %v813 = vadd.f32 0.0, %v812
    %v814 = vpop.f32.mrb[0].mxu0
    %v815 = vadd.f32 0.0, %v814
    %816 = vdwg.mxu0
    %v817 = vadd.f32 %v630, %v742
    %v818 = vadd.f32 %v631, %v744
    %v819 = vadd.f32 %v632, %v813
    %v820 = vadd.f32 %v633, %v815
    %v822 = vsel %vm156, %v73, 0
    %824 = vmatprep.subr.mxu0 %v66
    %825 = vmatpush1.msra.mxu0 %v65
    %826 = vmatprep.subr.mxu0 0.0
    %827 = vmatpush1.msra.mxu0 0.0
    %828 = vmatprep.subr.mxu0 0.0
    %829 = vmatpush1.msra.mxu0 0.0
    %830 = vmatprep.subr.mxu0 0.0
    %831 = vmatpush1.msra.mxu0 0.0
    %832 = vmatprep.subr.mxu0 0.0
    %833 = vmatpush1.msra.mxu0 0.0
    %834 = vmatprep.subr.mxu0 0.0
    %835 = vmatpush1.msra.mxu0 0.0
    %836 = vmatprep.subr.mxu0 0.0
    %837 = vmatpush1.msra.mxu0 0.0
    %838 = vmatprep.subr.mxu0 0.0
    %839 = vmatpush1.msra.mxu0 0.0
    %840 = vmatprep.subr.mxu0 0.0
    %841 = vmatpush1.msra.mxu0 0.0
    %842 = vmatprep.subr.mxu0 0.0
    %843 = vmatpush1.msra.mxu0 0.0
    %844 = vmatprep.subr.mxu0 0.0
    %845 = vmatpush1.msra.mxu0 0.0
    %846 = vmatprep.subr.mxu0 0.0
    %847 = vmatpush1.msra.mxu0 0.0
    %848 = vmatprep.subr.mxu0 0.0
    %849 = vmatpush1.msra.mxu0 0.0
    %850 = vmatprep.subr.mxu0 0.0
    %851 = vmatpush1.msra.mxu0 0.0
    %852 = vmatprep.subr.mxu0 0.0
    %853 = vmatpush1.msra.mxu0 0.0
    %854 = vmatprep.subr.mxu0 0.0
    %855 = vmatpush1.msra.mxu0 0.0
    %856 = vmatprep.subr.mxu0 0.0
    %857 = vmatpush1.msra.mxu0 0.0
    %858 = vmatprep.subr.mxu0 0.0
    %859 = vmatpush1.msra.mxu0 0.0
    %860 = vmatprep.subr.mxu0 0.0
    %861 = vmatpush1.msra.mxu0 0.0
    %862 = vmatprep.subr.mxu0 0.0
    %863 = vmatpush1.msra.mxu0 0.0
    %864 = vmatprep.subr.mxu0 0.0
    %865 = vmatpush1.msra.mxu0 0.0
    %866 = vmatprep.subr.mxu0 0.0
    %867 = vmatpush1.msra.mxu0 0.0
    %868 = vmatprep.subr.mxu0 0.0
    %869 = vmatpush1.msra.mxu0 0.0
    %870 = vmatprep.subr.mxu0 0.0
    %871 = vmatpush1.msra.mxu0 0.0
    %872 = vmatprep.subr.mxu0 0.0
    %873 = vmatpush1.msra.mxu0 0.0
    %874 = vmatprep.subr.mxu0 0.0
    %875 = vmatpush1.msra.mxu0 0.0
    %876 = vmatprep.subr.mxu0 0.0
    %877 = vmatpush1.msra.mxu0 0.0
    %878 = vmatprep.subr.mxu0 0.0
    %879 = vmatpush1.msra.mxu0 0.0
    %880 = vmatprep.subr.mxu0 0.0
    %881 = vmatpush1.msra.mxu0 0.0
    %882 = vmatprep.subr.mxu0 0.0
    %883 = vmatpush1.msra.mxu0 0.0
    %884 = vmatprep.subr.mxu0 0.0
    %885 = vmatpush1.msra.mxu0 0.0
    %886 = vmatprep.subr.mxu0 0.0
    %887 = vmatpush1.msra.mxu0 0.0
    %888 = vmatprep.mubr.f32.mxu0 0.0
    %889 = vmatmul.mubr.f32.gmra.mrb[0].mxu0 %v822
    %v890 = vpop.f32.mrb[0].mxu0
    %v891 = vadd.f32 0.0, %v890
    %v892 = vpop.f32.mrb[0].mxu0
    %v893 = vadd.f32 0.0, %v892
    %894 = vdwg.mxu0
    %895 = vmatprep.subr.mxu0 %v68
    %896 = vmatpush1.msra.mxu0 %v67
    %897 = vmatprep.subr.mxu0 0.0
    %898 = vmatpush1.msra.mxu0 0.0
    %899 = vmatprep.subr.mxu0 0.0
    %900 = vmatpush1.msra.mxu0 0.0
    %901 = vmatprep.subr.mxu0 0.0
    %902 = vmatpush1.msra.mxu0 0.0
    %903 = vmatprep.subr.mxu0 0.0
    %904 = vmatpush1.msra.mxu0 0.0
    %905 = vmatprep.subr.mxu0 0.0
    %906 = vmatpush1.msra.mxu0 0.0
    %907 = vmatprep.subr.mxu0 0.0
    %908 = vmatpush1.msra.mxu0 0.0
    %909 = vmatprep.subr.mxu0 0.0
    %910 = vmatpush1.msra.mxu0 0.0
    %911 = vmatprep.subr.mxu0 0.0
    %912 = vmatpush1.msra.mxu0 0.0
    %913 = vmatprep.subr.mxu0 0.0
    %914 = vmatpush1.msra.mxu0 0.0
    %915 = vmatprep.subr.mxu0 0.0
    %916 = vmatpush1.msra.mxu0 0.0
    %917 = vmatprep.subr.mxu0 0.0
    %918 = vmatpush1.msra.mxu0 0.0
    %919 = vmatprep.subr.mxu0 0.0
    %920 = vmatpush1.msra.mxu0 0.0
    %921 = vmatprep.subr.mxu0 0.0
    %922 = vmatpush1.msra.mxu0 0.0
    %923 = vmatprep.subr.mxu0 0.0
    %924 = vmatpush1.msra.mxu0 0.0
    %925 = vmatprep.subr.mxu0 0.0
    %926 = vmatpush1.msra.mxu0 0.0
    %927 = vmatprep.subr.mxu0 0.0
    %928 = vmatpush1.msra.mxu0 0.0
    %929 = vmatprep.subr.mxu0 0.0
    %930 = vmatpush1.msra.mxu0 0.0
    %931 = vmatprep.subr.mxu0 0.0
    %932 = vmatpush1.msra.mxu0 0.0
    %933 = vmatprep.subr.mxu0 0.0
    %934 = vmatpush1.msra.mxu0 0.0
    %935 = vmatprep.subr.mxu0 0.0
    %936 = vmatpush1.msra.mxu0 0.0
    %937 = vmatprep.subr.mxu0 0.0
    %938 = vmatpush1.msra.mxu0 0.0
    %939 = vmatprep.subr.mxu0 0.0
    %940 = vmatpush1.msra.mxu0 0.0
    %941 = vmatprep.subr.mxu0 0.0
    %942 = vmatpush1.msra.mxu0 0.0
    %943 = vmatprep.subr.mxu0 0.0
    %944 = vmatpush1.msra.mxu0 0.0
    %945 = vmatprep.subr.mxu0 0.0
    %946 = vmatpush1.msra.mxu0 0.0
    %947 = vmatprep.subr.mxu0 0.0
    %948 = vmatpush1.msra.mxu0 0.0
    %949 = vmatprep.subr.mxu0 0.0
    %950 = vmatpush1.msra.mxu0 0.0
    %951 = vmatprep.subr.mxu0 0.0
    %952 = vmatpush1.msra.mxu0 0.0
    %953 = vmatprep.subr.mxu0 0.0
    %954 = vmatpush1.msra.mxu0 0.0
    %955 = vmatprep.subr.mxu0 0.0
    %956 = vmatpush1.msra.mxu0 0.0
    %957 = vmatprep.subr.mxu0 0.0
    %958 = vmatpush1.msra.mxu0 0.0
    %959 = vmatprep.mubr.f32.mxu0 0.0
    %960 = vmatmul.mubr.f32.gmra.mrb[0].mxu0 %v822
    %v961 = vpop.f32.mrb[0].mxu0
    %v962 = vadd.f32 0.0, %v961
    %v963 = vpop.f32.mrb[0].mxu0
    %v964 = vadd.f32 0.0, %v963
    %965 = vdwg.mxu0
    %v966 = vadd.f32 %v817, %v891
    %v967 = vadd.f32 %v818, %v893
    %v968 = vadd.f32 %v819, %v962
    %v969 = vadd.f32 %v820, %v964
    %970 = vrot.lane.b32.xlu0 %v65, 127
    %v971 = vpop.permute.xlu0 %970
    %972 = vrot.lane.b32.xlu0 %v66, 127
    %v973 = vpop.permute.xlu0 %972
    %974 = vrot.lane.b32.xlu0 %v67, 127
    %v975 = vpop.permute.xlu0 %974
    %976 = vrot.lane.b32.xlu0 %v68, 127
    %v977 = vpop.permute.xlu0 %976
    %vm978 = vcmp.lt.s32.totalorder %v87, 127
    %v979 = vsel %vm978, %v975, %v977
    %v980 = vsel %vm978, %v973, %v975
    %v981 = vsel %vm978, %v971, %v973
    %v982 = vsel %vm978, %v977, %v971
    %v984 = vlaneseq
    %v985 = vshrl.u32 %v984, 7
    %v986 = vsub.s32 0, %v985
    %v987 = vrot.slane %v49, %v986
    %v988 = vlaneseq
    %v989 = vshrl.u32 %v988, 7
    %v990 = vsub.s32 1, %v989
    %v991 = vrot.slane %v49, %v990
    %v992 = vlaneseq
    %v993 = vshrl.u32 %v992, 7
    %v994 = vsub.s32 2, %v993
    %v995 = vrot.slane %v49, %v994
    %v996 = vlaneseq
    %v997 = vshrl.u32 %v996, 7
    %v998 = vsub.s32 3, %v997
    %v999 = vrot.slane %v49, %v998
    %v1004 = vmul.f32 %v981, %v987
    %v1005 = vmul.f32 %v980, %v991
    %v1006 = vmul.f32 %v979, %v995
    %v1007 = vmul.f32 %v982, %v999
    %v1009 = vsel %vm156, %v74, 0
    %1011 = vmatprep.subr.mxu0 %v1005
    %1012 = vmatpush1.msra.mxu0 %v1004
    %1013 = vmatprep.subr.mxu0 0.0
    %1014 = vmatpush1.msra.mxu0 0.0
    %1015 = vmatprep.subr.mxu0 0.0
    %1016 = vmatpush1.msra.mxu0 0.0
    %1017 = vmatprep.subr.mxu0 0.0
    %1018 = vmatpush1.msra.mxu0 0.0
    %1019 = vmatprep.subr.mxu0 0.0
    %1020 = vmatpush1.msra.mxu0 0.0
    %1021 = vmatprep.subr.mxu0 0.0
    %1022 = vmatpush1.msra.mxu0 0.0
    %1023 = vmatprep.subr.mxu0 0.0
    %1024 = vmatpush1.msra.mxu0 0.0
    %1025 = vmatprep.subr.mxu0 0.0
    %1026 = vmatpush1.msra.mxu0 0.0
    %1027 = vmatprep.subr.mxu0 0.0
    %1028 = vmatpush1.msra.mxu0 0.0
    %1029 = vmatprep.subr.mxu0 0.0
    %1030 = vmatpush1.msra.mxu0 0.0
    %1031 = vmatprep.subr.mxu0 0.0
    %1032 = vmatpush1.msra.mxu0 0.0
    %1033 = vmatprep.subr.mxu0 0.0
    %1034 = vmatpush1.msra.mxu0 0.0
    %1035 = vmatprep.subr.mxu0 0.0
    %1036 = vmatpush1.msra.mxu0 0.0
    %1037 = vmatprep.subr.mxu0 0.0
    %1038 = vmatpush1.msra.mxu0 0.0
    %1039 = vmatprep.subr.mxu0 0.0
    %1040 = vmatpush1.msra.mxu0 0.0
    %1041 = vmatprep.subr.mxu0 0.0
    %1042 = vmatpush1.msra.mxu0 0.0
    %1043 = vmatprep.subr.mxu0 0.0
    %1044 = vmatpush1.msra.mxu0 0.0
    %1045 = vmatprep.subr.mxu0 0.0
    %1046 = vmatpush1.msra.mxu0 0.0
    %1047 = vmatprep.subr.mxu0 0.0
    %1048 = vmatpush1.msra.mxu0 0.0
    %1049 = vmatprep.subr.mxu0 0.0
    %1050 = vmatpush1.msra.mxu0 0.0
    %1051 = vmatprep.subr.mxu0 0.0
    %1052 = vmatpush1.msra.mxu0 0.0
    %1053 = vmatprep.subr.mxu0 0.0
    %1054 = vmatpush1.msra.mxu0 0.0
    %1055 = vmatprep.subr.mxu0 0.0
    %1056 = vmatpush1.msra.mxu0 0.0
    %1057 = vmatprep.subr.mxu0 0.0
    %1058 = vmatpush1.msra.mxu0 0.0
    %1059 = vmatprep.subr.mxu0 0.0
    %1060 = vmatpush1.msra.mxu0 0.0
    %1061 = vmatprep.subr.mxu0 0.0
    %1062 = vmatpush1.msra.mxu0 0.0
    %1063 = vmatprep.subr.mxu0 0.0
    %1064 = vmatpush1.msra.mxu0 0.0
    %1065 = vmatprep.subr.mxu0 0.0
    %1066 = vmatpush1.msra.mxu0 0.0
    %1067 = vmatprep.subr.mxu0 0.0
    %1068 = vmatpush1.msra.mxu0 0.0
    %1069 = vmatprep.subr.mxu0 0.0
    %1070 = vmatpush1.msra.mxu0 0.0
    %1071 = vmatprep.subr.mxu0 0.0
    %1072 = vmatpush1.msra.mxu0 0.0
    %1073 = vmatprep.subr.mxu0 0.0
    %1074 = vmatpush1.msra.mxu0 0.0
    %1075 = vmatprep.mubr.f32.mxu0 0.0
    %1076 = vmatmul.mubr.f32.gmra.mrb[0].mxu0 %v1009
    %v1077 = vpop.f32.mrb[0].mxu0
    %v1078 = vadd.f32 0.0, %v1077
    %v1079 = vpop.f32.mrb[0].mxu0
    %v1080 = vadd.f32 0.0, %v1079
    %1081 = vdwg.mxu0
    %1082 = vmatprep.subr.mxu0 %v1007
    %1083 = vmatpush1.msra.mxu0 %v1006
    %1084 = vmatprep.subr.mxu0 0.0
    %1085 = vmatpush1.msra.mxu0 0.0
    %1086 = vmatprep.subr.mxu0 0.0
    %1087 = vmatpush1.msra.mxu0 0.0
    %1088 = vmatprep.subr.mxu0 0.0
    %1089 = vmatpush1.msra.mxu0 0.0
    %1090 = vmatprep.subr.mxu0 0.0
    %1091 = vmatpush1.msra.mxu0 0.0
    %1092 = vmatprep.subr.mxu0 0.0
    %1093 = vmatpush1.msra.mxu0 0.0
    %1094 = vmatprep.subr.mxu0 0.0
    %1095 = vmatpush1.msra.mxu0 0.0
    %1096 = vmatprep.subr.mxu0 0.0
    %1097 = vmatpush1.msra.mxu0 0.0
    %1098 = vmatprep.subr.mxu0 0.0
    %1099 = vmatpush1.msra.mxu0 0.0
    %1100 = vmatprep.subr.mxu0 0.0
    %1101 = vmatpush1.msra.mxu0 0.0
    %1102 = vmatprep.subr.mxu0 0.0
    %1103 = vmatpush1.msra.mxu0 0.0
    %1104 = vmatprep.subr.mxu0 0.0
    %1105 = vmatpush1.msra.mxu0 0.0
    %1106 = vmatprep.subr.mxu0 0.0
    %1107 = vmatpush1.msra.mxu0 0.0
    %1108 = vmatprep.subr.mxu0 0.0
    %1109 = vmatpush1.msra.mxu0 0.0
    %1110 = vmatprep.subr.mxu0 0.0
    %1111 = vmatpush1.msra.mxu0 0.0
    %1112 = vmatprep.subr.mxu0 0.0
    %1113 = vmatpush1.msra.mxu0 0.0
    %1114 = vmatprep.subr.mxu0 0.0
    %1115 = vmatpush1.msra.mxu0 0.0
    %1116 = vmatprep.subr.mxu0 0.0
    %1117 = vmatpush1.msra.mxu0 0.0
    %1118 = vmatprep.subr.mxu0 0.0
    %1119 = vmatpush1.msra.mxu0 0.0
    %1120 = vmatprep.subr.mxu0 0.0
    %1121 = vmatpush1.msra.mxu0 0.0
    %1122 = vmatprep.subr.mxu0 0.0
    %1123 = vmatpush1.msra.mxu0 0.0
    %1124 = vmatprep.subr.mxu0 0.0
    %1125 = vmatpush1.msra.mxu0 0.0
    %1126 = vmatprep.subr.mxu0 0.0
    %1127 = vmatpush1.msra.mxu0 0.0
    %1128 = vmatprep.subr.mxu0 0.0
    %1129 = vmatpush1.msra.mxu0 0.0
    %1130 = vmatprep.subr.mxu0 0.0
    %1131 = vmatpush1.msra.mxu0 0.0
    %1132 = vmatprep.subr.mxu0 0.0
    %1133 = vmatpush1.msra.mxu0 0.0
    %1134 = vmatprep.subr.mxu0 0.0
    %1135 = vmatpush1.msra.mxu0 0.0
    %1136 = vmatprep.subr.mxu0 0.0
    %1137 = vmatpush1.msra.mxu0 0.0
    %1138 = vmatprep.subr.mxu0 0.0
    %1139 = vmatpush1.msra.mxu0 0.0
    %1140 = vmatprep.subr.mxu0 0.0
    %1141 = vmatpush1.msra.mxu0 0.0
    %1142 = vmatprep.subr.mxu0 0.0
    %1143 = vmatpush1.msra.mxu0 0.0
    %1144 = vmatprep.subr.mxu0 0.0
    %1145 = vmatpush1.msra.mxu0 0.0
    %1146 = vmatprep.mubr.f32.mxu0 0.0
    %1147 = vmatmul.mubr.f32.gmra.mrb[0].mxu0 %v1009
    %v1148 = vpop.f32.mrb[0].mxu0
    %v1149 = vadd.f32 0.0, %v1148
    %v1150 = vpop.f32.mrb[0].mxu0
    %v1151 = vadd.f32 0.0, %v1150
    %1152 = vdwg.mxu0
    %v1153 = vadd.f32 %v966, %v1078
    %v1154 = vadd.f32 %v967, %v1080
    %v1155 = vadd.f32 %v968, %v1149
    %v1156 = vadd.f32 %v969, %v1151
    %1157 = vrot.lane.b32.xlu0 %v65, 113
    %v1158 = vpop.permute.xlu0 %1157
    %1159 = vrot.lane.b32.xlu0 %v66, 113
    %v1160 = vpop.permute.xlu0 %1159
    %1161 = vrot.lane.b32.xlu0 %v67, 113
    %v1162 = vpop.permute.xlu0 %1161
    %1163 = vrot.lane.b32.xlu0 %v68, 113
    %v1164 = vpop.permute.xlu0 %1163
    %vm1165 = vcmp.lt.s32.totalorder %v87, 113
    %v1166 = vsel %vm1165, %v1162, %v1164
    %v1167 = vsel %vm1165, %v1160, %v1162
    %v1168 = vsel %vm1165, %v1158, %v1160
    %v1169 = vsel %vm1165, %v1164, %v1158
    %v1171 = vlaneseq
    %v1172 = vshrl.u32 %v1171, 7
    %v1173 = vsub.s32 0, %v1172
    %v1174 = vrot.slane %v56, %v1173
    %v1175 = vlaneseq
    %v1176 = vshrl.u32 %v1175, 7
    %v1177 = vsub.s32 1, %v1176
    %v1178 = vrot.slane %v56, %v1177
    %v1179 = vlaneseq
    %v1180 = vshrl.u32 %v1179, 7
    %v1181 = vsub.s32 2, %v1180
    %v1182 = vrot.slane %v56, %v1181
    %v1183 = vlaneseq
    %v1184 = vshrl.u32 %v1183, 7
    %v1185 = vsub.s32 3, %v1184
    %v1186 = vrot.slane %v56, %v1185
    %v1191 = vmul.f32 %v1168, %v1174
    %v1192 = vmul.f32 %v1167, %v1178
    %v1193 = vmul.f32 %v1166, %v1182
    %v1194 = vmul.f32 %v1169, %v1186
    %v1196 = vsel %vm156, %v75, 0
    %1198 = vmatprep.subr.mxu0 %v1192
    %1199 = vmatpush1.msra.mxu0 %v1191
    %1200 = vmatprep.subr.mxu0 0.0
    %1201 = vmatpush1.msra.mxu0 0.0
    %1202 = vmatprep.subr.mxu0 0.0
    %1203 = vmatpush1.msra.mxu0 0.0
    %1204 = vmatprep.subr.mxu0 0.0
    %1205 = vmatpush1.msra.mxu0 0.0
    %1206 = vmatprep.subr.mxu0 0.0
    %1207 = vmatpush1.msra.mxu0 0.0
    %1208 = vmatprep.subr.mxu0 0.0
    %1209 = vmatpush1.msra.mxu0 0.0
    %1210 = vmatprep.subr.mxu0 0.0
    %1211 = vmatpush1.msra.mxu0 0.0
    %1212 = vmatprep.subr.mxu0 0.0
    %1213 = vmatpush1.msra.mxu0 0.0
    %1214 = vmatprep.subr.mxu0 0.0
    %1215 = vmatpush1.msra.mxu0 0.0
    %1216 = vmatprep.subr.mxu0 0.0
    %1217 = vmatpush1.msra.mxu0 0.0
    %1218 = vmatprep.subr.mxu0 0.0
    %1219 = vmatpush1.msra.mxu0 0.0
    %1220 = vmatprep.subr.mxu0 0.0
    %1221 = vmatpush1.msra.mxu0 0.0
    %1222 = vmatprep.subr.mxu0 0.0
    %1223 = vmatpush1.msra.mxu0 0.0
    %1224 = vmatprep.subr.mxu0 0.0
    %1225 = vmatpush1.msra.mxu0 0.0
    %1226 = vmatprep.subr.mxu0 0.0
    %1227 = vmatpush1.msra.mxu0 0.0
    %1228 = vmatprep.subr.mxu0 0.0
    %1229 = vmatpush1.msra.mxu0 0.0
    %1230 = vmatprep.subr.mxu0 0.0
    %1231 = vmatpush1.msra.mxu0 0.0
    %1232 = vmatprep.subr.mxu0 0.0
    %1233 = vmatpush1.msra.mxu0 0.0
    %1234 = vmatprep.subr.mxu0 0.0
    %1235 = vmatpush1.msra.mxu0 0.0
    %1236 = vmatprep.subr.mxu0 0.0
    %1237 = vmatpush1.msra.mxu0 0.0
    %1238 = vmatprep.subr.mxu0 0.0
    %1239 = vmatpush1.msra.mxu0 0.0
    %1240 = vmatprep.subr.mxu0 0.0
    %1241 = vmatpush1.msra.mxu0 0.0
    %1242 = vmatprep.subr.mxu0 0.0
    %1243 = vmatpush1.msra.mxu0 0.0
    %1244 = vmatprep.subr.mxu0 0.0
    %1245 = vmatpush1.msra.mxu0 0.0
    %1246 = vmatprep.subr.mxu0 0.0
    %1247 = vmatpush1.msra.mxu0 0.0
    %1248 = vmatprep.subr.mxu0 0.0
    %1249 = vmatpush1.msra.mxu0 0.0
    %1250 = vmatprep.subr.mxu0 0.0
    %1251 = vmatpush1.msra.mxu0 0.0
    %1252 = vmatprep.subr.mxu0 0.0
    %1253 = vmatpush1.msra.mxu0 0.0
    %1254 = vmatprep.subr.mxu0 0.0
    %1255 = vmatpush1.msra.mxu0 0.0
    %1256 = vmatprep.subr.mxu0 0.0
    %1257 = vmatpush1.msra.mxu0 0.0
    %1258 = vmatprep.subr.mxu0 0.0
    %1259 = vmatpush1.msra.mxu0 0.0
    %1260 = vmatprep.subr.mxu0 0.0
    %1261 = vmatpush1.msra.mxu0 0.0
    %1262 = vmatprep.mubr.f32.mxu0 0.0
    %1263 = vmatmul.mubr.f32.gmra.mrb[0].mxu0 %v1196
    %v1264 = vpop.f32.mrb[0].mxu0
    %v1265 = vadd.f32 0.0, %v1264
    %v1266 = vpop.f32.mrb[0].mxu0
    %v1267 = vadd.f32 0.0, %v1266
    %1268 = vdwg.mxu0
    %1269 = vmatprep.subr.mxu0 %v1194
    %1270 = vmatpush1.msra.mxu0 %v1193
    %1271 = vmatprep.subr.mxu0 0.0
    %1272 = vmatpush1.msra.mxu0 0.0
    %1273 = vmatprep.subr.mxu0 0.0
    %1274 = vmatpush1.msra.mxu0 0.0
    %1275 = vmatprep.subr.mxu0 0.0
    %1276 = vmatpush1.msra.mxu0 0.0
    %1277 = vmatprep.subr.mxu0 0.0
    %1278 = vmatpush1.msra.mxu0 0.0
    %1279 = vmatprep.subr.mxu0 0.0
    %1280 = vmatpush1.msra.mxu0 0.0
    %1281 = vmatprep.subr.mxu0 0.0
    %1282 = vmatpush1.msra.mxu0 0.0
    %1283 = vmatprep.subr.mxu0 0.0
    %1284 = vmatpush1.msra.mxu0 0.0
    %1285 = vmatprep.subr.mxu0 0.0
    %1286 = vmatpush1.msra.mxu0 0.0
    %1287 = vmatprep.subr.mxu0 0.0
    %1288 = vmatpush1.msra.mxu0 0.0
    %1289 = vmatprep.subr.mxu0 0.0
    %1290 = vmatpush1.msra.mxu0 0.0
    %1291 = vmatprep.subr.mxu0 0.0
    %1292 = vmatpush1.msra.mxu0 0.0
    %1293 = vmatprep.subr.mxu0 0.0
    %1294 = vmatpush1.msra.mxu0 0.0
    %1295 = vmatprep.subr.mxu0 0.0
    %1296 = vmatpush1.msra.mxu0 0.0
    %1297 = vmatprep.subr.mxu0 0.0
    %1298 = vmatpush1.msra.mxu0 0.0
    %1299 = vmatprep.subr.mxu0 0.0
    %1300 = vmatpush1.msra.mxu0 0.0
    %1301 = vmatprep.subr.mxu0 0.0
    %1302 = vmatpush1.msra.mxu0 0.0
    %1303 = vmatprep.subr.mxu0 0.0
    %1304 = vmatpush1.msra.mxu0 0.0
    %1305 = vmatprep.subr.mxu0 0.0
    %1306 = vmatpush1.msra.mxu0 0.0
    %1307 = vmatprep.subr.mxu0 0.0
    %1308 = vmatpush1.msra.mxu0 0.0
    %1309 = vmatprep.subr.mxu0 0.0
    %1310 = vmatpush1.msra.mxu0 0.0
    %1311 = vmatprep.subr.mxu0 0.0
    %1312 = vmatpush1.msra.mxu0 0.0
    %1313 = vmatprep.subr.mxu0 0.0
    %1314 = vmatpush1.msra.mxu0 0.0
    %1315 = vmatprep.subr.mxu0 0.0
    %1316 = vmatpush1.msra.mxu0 0.0
    %1317 = vmatprep.subr.mxu0 0.0
    %1318 = vmatpush1.msra.mxu0 0.0
    %1319 = vmatprep.subr.mxu0 0.0
    %1320 = vmatpush1.msra.mxu0 0.0
    %1321 = vmatprep.subr.mxu0 0.0
    %1322 = vmatpush1.msra.mxu0 0.0
    %1323 = vmatprep.subr.mxu0 0.0
    %1324 = vmatpush1.msra.mxu0 0.0
    %1325 = vmatprep.subr.mxu0 0.0
    %1326 = vmatpush1.msra.mxu0 0.0
    %1327 = vmatprep.subr.mxu0 0.0
    %1328 = vmatpush1.msra.mxu0 0.0
    %1329 = vmatprep.subr.mxu0 0.0
    %1330 = vmatpush1.msra.mxu0 0.0
    %1331 = vmatprep.subr.mxu0 0.0
    %1332 = vmatpush1.msra.mxu0 0.0
    %1333 = vmatprep.mubr.f32.mxu0 0.0
    %1334 = vmatmul.mubr.f32.gmra.mrb[0].mxu0 %v1196
    %v1335 = vpop.f32.mrb[0].mxu0
    %v1336 = vadd.f32 0.0, %v1335
    %v1337 = vpop.f32.mrb[0].mxu0
    %v1338 = vadd.f32 0.0, %v1337
    %1339 = vdwg.mxu0
    %v1340 = vadd.f32 %v1153, %v1265
    %v1341 = vadd.f32 %v1154, %v1267
    %v1342 = vadd.f32 %v1155, %v1336
    %v1343 = vadd.f32 %v1156, %v1338
    %1344 = vrot.lane.b32.xlu0 %v65, 112
    %v1345 = vpop.permute.xlu0 %1344
    %1346 = vrot.lane.b32.xlu0 %v66, 112
    %v1347 = vpop.permute.xlu0 %1346
    %1348 = vrot.lane.b32.xlu0 %v67, 112
    %v1349 = vpop.permute.xlu0 %1348
    %1350 = vrot.lane.b32.xlu0 %v68, 112
    %v1351 = vpop.permute.xlu0 %1350
    %vm1352 = vcmp.lt.s32.totalorder %v87, 112
    %v1353 = vsel %vm1352, %v1349, %v1351
    %v1354 = vsel %vm1352, %v1347, %v1349
    %v1355 = vsel %vm1352, %v1345, %v1347
    %v1356 = vsel %vm1352, %v1351, %v1345
    %v1358 = vlaneseq
    %v1359 = vshrl.u32 %v1358, 7
    %v1360 = vsub.s32 0, %v1359
    %v1361 = vrot.slane %v60, %v1360
    %v1362 = vlaneseq
    %v1363 = vshrl.u32 %v1362, 7
    %v1364 = vsub.s32 1, %v1363
    %v1365 = vrot.slane %v60, %v1364
    %v1366 = vlaneseq
    %v1367 = vshrl.u32 %v1366, 7
    %v1368 = vsub.s32 2, %v1367
    %v1369 = vrot.slane %v60, %v1368
    %v1370 = vlaneseq
    %v1371 = vshrl.u32 %v1370, 7
    %v1372 = vsub.s32 3, %v1371
    %v1373 = vrot.slane %v60, %v1372
    %v1378 = vmul.f32 %v1355, %v1361
    %v1379 = vmul.f32 %v1354, %v1365
    %v1380 = vmul.f32 %v1353, %v1369
    %v1381 = vmul.f32 %v1356, %v1373
    %v1383 = vsel %vm156, %v76, 0
    %1385 = vmatprep.subr.mxu0 %v1379
    %1386 = vmatpush1.msra.mxu0 %v1378
    %1387 = vmatprep.subr.mxu0 0.0
    %1388 = vmatpush1.msra.mxu0 0.0
    %1389 = vmatprep.subr.mxu0 0.0
    %1390 = vmatpush1.msra.mxu0 0.0
    %1391 = vmatprep.subr.mxu0 0.0
    %1392 = vmatpush1.msra.mxu0 0.0
    %1393 = vmatprep.subr.mxu0 0.0
    %1394 = vmatpush1.msra.mxu0 0.0
    %1395 = vmatprep.subr.mxu0 0.0
    %1396 = vmatpush1.msra.mxu0 0.0
    %1397 = vmatprep.subr.mxu0 0.0
    %1398 = vmatpush1.msra.mxu0 0.0
    %1399 = vmatprep.subr.mxu0 0.0
    %1400 = vmatpush1.msra.mxu0 0.0
    %1401 = vmatprep.subr.mxu0 0.0
    %1402 = vmatpush1.msra.mxu0 0.0
    %1403 = vmatprep.subr.mxu0 0.0
    %1404 = vmatpush1.msra.mxu0 0.0
    %1405 = vmatprep.subr.mxu0 0.0
    %1406 = vmatpush1.msra.mxu0 0.0
    %1407 = vmatprep.subr.mxu0 0.0
    %1408 = vmatpush1.msra.mxu0 0.0
    %1409 = vmatprep.subr.mxu0 0.0
    %1410 = vmatpush1.msra.mxu0 0.0
    %1411 = vmatprep.subr.mxu0 0.0
    %1412 = vmatpush1.msra.mxu0 0.0
    %1413 = vmatprep.subr.mxu0 0.0
    %1414 = vmatpush1.msra.mxu0 0.0
    %1415 = vmatprep.subr.mxu0 0.0
    %1416 = vmatpush1.msra.mxu0 0.0
    %1417 = vmatprep.subr.mxu0 0.0
    %1418 = vmatpush1.msra.mxu0 0.0
    %1419 = vmatprep.subr.mxu0 0.0
    %1420 = vmatpush1.msra.mxu0 0.0
    %1421 = vmatprep.subr.mxu0 0.0
    %1422 = vmatpush1.msra.mxu0 0.0
    %1423 = vmatprep.subr.mxu0 0.0
    %1424 = vmatpush1.msra.mxu0 0.0
    %1425 = vmatprep.subr.mxu0 0.0
    %1426 = vmatpush1.msra.mxu0 0.0
    %1427 = vmatprep.subr.mxu0 0.0
    %1428 = vmatpush1.msra.mxu0 0.0
    %1429 = vmatprep.subr.mxu0 0.0
    %1430 = vmatpush1.msra.mxu0 0.0
    %1431 = vmatprep.subr.mxu0 0.0
    %1432 = vmatpush1.msra.mxu0 0.0
    %1433 = vmatprep.subr.mxu0 0.0
    %1434 = vmatpush1.msra.mxu0 0.0
    %1435 = vmatprep.subr.mxu0 0.0
    %1436 = vmatpush1.msra.mxu0 0.0
    %1437 = vmatprep.subr.mxu0 0.0
    %1438 = vmatpush1.msra.mxu0 0.0
    %1439 = vmatprep.subr.mxu0 0.0
    %1440 = vmatpush1.msra.mxu0 0.0
    %1441 = vmatprep.subr.mxu0 0.0
    %1442 = vmatpush1.msra.mxu0 0.0
    %1443 = vmatprep.subr.mxu0 0.0
    %1444 = vmatpush1.msra.mxu0 0.0
    %1445 = vmatprep.subr.mxu0 0.0
    %1446 = vmatpush1.msra.mxu0 0.0
    %1447 = vmatprep.subr.mxu0 0.0
    %1448 = vmatpush1.msra.mxu0 0.0
    %1449 = vmatprep.mubr.f32.mxu0 0.0
    %1450 = vmatmul.mubr.f32.gmra.mrb[0].mxu0 %v1383
    %v1451 = vpop.f32.mrb[0].mxu0
    %v1452 = vadd.f32 0.0, %v1451
    %v1453 = vpop.f32.mrb[0].mxu0
    %v1454 = vadd.f32 0.0, %v1453
    %1455 = vdwg.mxu0
    %1456 = vmatprep.subr.mxu0 %v1381
    %1457 = vmatpush1.msra.mxu0 %v1380
    %1458 = vmatprep.subr.mxu0 0.0
    %1459 = vmatpush1.msra.mxu0 0.0
    %1460 = vmatprep.subr.mxu0 0.0
    %1461 = vmatpush1.msra.mxu0 0.0
    %1462 = vmatprep.subr.mxu0 0.0
    %1463 = vmatpush1.msra.mxu0 0.0
    %1464 = vmatprep.subr.mxu0 0.0
    %1465 = vmatpush1.msra.mxu0 0.0
    %1466 = vmatprep.subr.mxu0 0.0
    %1467 = vmatpush1.msra.mxu0 0.0
    %1468 = vmatprep.subr.mxu0 0.0
    %1469 = vmatpush1.msra.mxu0 0.0
    %1470 = vmatprep.subr.mxu0 0.0
    %1471 = vmatpush1.msra.mxu0 0.0
    %1472 = vmatprep.subr.mxu0 0.0
    %1473 = vmatpush1.msra.mxu0 0.0
    %1474 = vmatprep.subr.mxu0 0.0
    %1475 = vmatpush1.msra.mxu0 0.0
    %1476 = vmatprep.subr.mxu0 0.0
    %1477 = vmatpush1.msra.mxu0 0.0
    %1478 = vmatprep.subr.mxu0 0.0
    %1479 = vmatpush1.msra.mxu0 0.0
    %1480 = vmatprep.subr.mxu0 0.0
    %1481 = vmatpush1.msra.mxu0 0.0
    %1482 = vmatprep.subr.mxu0 0.0
    %1483 = vmatpush1.msra.mxu0 0.0
    %1484 = vmatprep.subr.mxu0 0.0
    %1485 = vmatpush1.msra.mxu0 0.0
    %1486 = vmatprep.subr.mxu0 0.0
    %1487 = vmatpush1.msra.mxu0 0.0
    %1488 = vmatprep.subr.mxu0 0.0
    %1489 = vmatpush1.msra.mxu0 0.0
    %1490 = vmatprep.subr.mxu0 0.0
    %1491 = vmatpush1.msra.mxu0 0.0
    %1492 = vmatprep.subr.mxu0 0.0
    %1493 = vmatpush1.msra.mxu0 0.0
    %1494 = vmatprep.subr.mxu0 0.0
    %1495 = vmatpush1.msra.mxu0 0.0
    %1496 = vmatprep.subr.mxu0 0.0
    %1497 = vmatpush1.msra.mxu0 0.0
    %1498 = vmatprep.subr.mxu0 0.0
    %1499 = vmatpush1.msra.mxu0 0.0
    %1500 = vmatprep.subr.mxu0 0.0
    %1501 = vmatpush1.msra.mxu0 0.0
    %1502 = vmatprep.subr.mxu0 0.0
    %1503 = vmatpush1.msra.mxu0 0.0
    %1504 = vmatprep.subr.mxu0 0.0
    %1505 = vmatpush1.msra.mxu0 0.0
    %1506 = vmatprep.subr.mxu0 0.0
    %1507 = vmatpush1.msra.mxu0 0.0
    %1508 = vmatprep.subr.mxu0 0.0
    %1509 = vmatpush1.msra.mxu0 0.0
    %1510 = vmatprep.subr.mxu0 0.0
    %1511 = vmatpush1.msra.mxu0 0.0
    %1512 = vmatprep.subr.mxu0 0.0
    %1513 = vmatpush1.msra.mxu0 0.0
    %1514 = vmatprep.subr.mxu0 0.0
    %1515 = vmatpush1.msra.mxu0 0.0
    %1516 = vmatprep.subr.mxu0 0.0
    %1517 = vmatpush1.msra.mxu0 0.0
    %1518 = vmatprep.subr.mxu0 0.0
    %1519 = vmatpush1.msra.mxu0 0.0
    %1520 = vmatprep.mubr.f32.mxu0 0.0
    %1521 = vmatmul.mubr.f32.gmra.mrb[0].mxu0 %v1383
    %v1522 = vpop.f32.mrb[0].mxu0
    %v1523 = vadd.f32 0.0, %v1522
    %v1524 = vpop.f32.mrb[0].mxu0
    %v1525 = vadd.f32 0.0, %v1524
    %1526 = vdwg.mxu0
    %v1527 = vadd.f32 %v1340, %v1452
    %v1528 = vadd.f32 %v1341, %v1454
    %v1529 = vadd.f32 %v1342, %v1523
    %v1530 = vadd.f32 %v1343, %v1525
    %1531 = vrot.lane.b32.xlu0 %v65, 111
    %v1532 = vpop.permute.xlu0 %1531
    %1533 = vrot.lane.b32.xlu0 %v66, 111
    %v1534 = vpop.permute.xlu0 %1533
    %1535 = vrot.lane.b32.xlu0 %v67, 111
    %v1536 = vpop.permute.xlu0 %1535
    %1537 = vrot.lane.b32.xlu0 %v68, 111
    %v1538 = vpop.permute.xlu0 %1537
    %vm1539 = vcmp.lt.s32.totalorder %v87, 111
    %v1540 = vsel %vm1539, %v1536, %v1538
    %v1541 = vsel %vm1539, %v1534, %v1536
    %v1542 = vsel %vm1539, %v1532, %v1534
    %v1543 = vsel %vm1539, %v1538, %v1532
    %v1545 = vlaneseq
    %v1546 = vshrl.u32 %v1545, 7
    %v1547 = vsub.s32 0, %v1546
    %v1548 = vrot.slane %v64, %v1547
    %v1549 = vlaneseq
    %v1550 = vshrl.u32 %v1549, 7
    %v1551 = vsub.s32 1, %v1550
    %v1552 = vrot.slane %v64, %v1551
    %v1553 = vlaneseq
    %v1554 = vshrl.u32 %v1553, 7
    %v1555 = vsub.s32 2, %v1554
    %v1556 = vrot.slane %v64, %v1555
    %v1557 = vlaneseq
    %v1558 = vshrl.u32 %v1557, 7
    %v1559 = vsub.s32 3, %v1558
    %v1560 = vrot.slane %v64, %v1559
    %v1565 = vmul.f32 %v1542, %v1548
    %v1566 = vmul.f32 %v1541, %v1552
    %v1567 = vmul.f32 %v1540, %v1556
    %v1568 = vmul.f32 %v1543, %v1560
    %v1570 = vsel %vm156, %v77, 0
    %1572 = vmatprep.subr.mxu0 %v1566
    %1573 = vmatpush1.msra.mxu0 %v1565
    %1574 = vmatprep.subr.mxu0 0.0
    %1575 = vmatpush1.msra.mxu0 0.0
    %1576 = vmatprep.subr.mxu0 0.0
    %1577 = vmatpush1.msra.mxu0 0.0
    %1578 = vmatprep.subr.mxu0 0.0
    %1579 = vmatpush1.msra.mxu0 0.0
    %1580 = vmatprep.subr.mxu0 0.0
    %1581 = vmatpush1.msra.mxu0 0.0
    %1582 = vmatprep.subr.mxu0 0.0
    %1583 = vmatpush1.msra.mxu0 0.0
    %1584 = vmatprep.subr.mxu0 0.0
    %1585 = vmatpush1.msra.mxu0 0.0
    %1586 = vmatprep.subr.mxu0 0.0
    %1587 = vmatpush1.msra.mxu0 0.0
    %1588 = vmatprep.subr.mxu0 0.0
    %1589 = vmatpush1.msra.mxu0 0.0
    %1590 = vmatprep.subr.mxu0 0.0
    %1591 = vmatpush1.msra.mxu0 0.0
    %1592 = vmatprep.subr.mxu0 0.0
    %1593 = vmatpush1.msra.mxu0 0.0
    %1594 = vmatprep.subr.mxu0 0.0
    %1595 = vmatpush1.msra.mxu0 0.0
    %1596 = vmatprep.subr.mxu0 0.0
    %1597 = vmatpush1.msra.mxu0 0.0
    %1598 = vmatprep.subr.mxu0 0.0
    %1599 = vmatpush1.msra.mxu0 0.0
    %1600 = vmatprep.subr.mxu0 0.0
    %1601 = vmatpush1.msra.mxu0 0.0
    %1602 = vmatprep.subr.mxu0 0.0
    %1603 = vmatpush1.msra.mxu0 0.0
    %1604 = vmatprep.subr.mxu0 0.0
    %1605 = vmatpush1.msra.mxu0 0.0
    %1606 = vmatprep.subr.mxu0 0.0
    %1607 = vmatpush1.msra.mxu0 0.0
    %1608 = vmatprep.subr.mxu0 0.0
    %1609 = vmatpush1.msra.mxu0 0.0
    %1610 = vmatprep.subr.mxu0 0.0
    %1611 = vmatpush1.msra.mxu0 0.0
    %1612 = vmatprep.subr.mxu0 0.0
    %1613 = vmatpush1.msra.mxu0 0.0
    %1614 = vmatprep.subr.mxu0 0.0
    %1615 = vmatpush1.msra.mxu0 0.0
    %1616 = vmatprep.subr.mxu0 0.0
    %1617 = vmatpush1.msra.mxu0 0.0
    %1618 = vmatprep.subr.mxu0 0.0
    %1619 = vmatpush1.msra.mxu0 0.0
    %1620 = vmatprep.subr.mxu0 0.0
    %1621 = vmatpush1.msra.mxu0 0.0
    %1622 = vmatprep.subr.mxu0 0.0
    %1623 = vmatpush1.msra.mxu0 0.0
    %1624 = vmatprep.subr.mxu0 0.0
    %1625 = vmatpush1.msra.mxu0 0.0
    %1626 = vmatprep.subr.mxu0 0.0
    %1627 = vmatpush1.msra.mxu0 0.0
    %1628 = vmatprep.subr.mxu0 0.0
    %1629 = vmatpush1.msra.mxu0 0.0
    %1630 = vmatprep.subr.mxu0 0.0
    %1631 = vmatpush1.msra.mxu0 0.0
    %1632 = vmatprep.subr.mxu0 0.0
    %1633 = vmatpush1.msra.mxu0 0.0
    %1634 = vmatprep.subr.mxu0 0.0
    %1635 = vmatpush1.msra.mxu0 0.0
    %1636 = vmatprep.mubr.f32.mxu0 0.0
    %1637 = vmatmul.mubr.f32.gmra.mrb[0].mxu0 %v1570
    %v1638 = vpop.f32.mrb[0].mxu0
    %v1639 = vadd.f32 0.0, %v1638
    %v1640 = vpop.f32.mrb[0].mxu0
    %v1641 = vadd.f32 0.0, %v1640
    %1642 = vdwg.mxu0
    %1643 = vmatprep.subr.mxu0 %v1568
    %1644 = vmatpush1.msra.mxu0 %v1567
    %1645 = vmatprep.subr.mxu0 0.0
    %1646 = vmatpush1.msra.mxu0 0.0
    %1647 = vmatprep.subr.mxu0 0.0
    %1648 = vmatpush1.msra.mxu0 0.0
    %1649 = vmatprep.subr.mxu0 0.0
    %1650 = vmatpush1.msra.mxu0 0.0
    %1651 = vmatprep.subr.mxu0 0.0
    %1652 = vmatpush1.msra.mxu0 0.0
    %1653 = vmatprep.subr.mxu0 0.0
    %1654 = vmatpush1.msra.mxu0 0.0
    %1655 = vmatprep.subr.mxu0 0.0
    %1656 = vmatpush1.msra.mxu0 0.0
    %1657 = vmatprep.subr.mxu0 0.0
    %1658 = vmatpush1.msra.mxu0 0.0
    %1659 = vmatprep.subr.mxu0 0.0
    %1660 = vmatpush1.msra.mxu0 0.0
    %1661 = vmatprep.subr.mxu0 0.0
    %1662 = vmatpush1.msra.mxu0 0.0
    %1663 = vmatprep.subr.mxu0 0.0
    %1664 = vmatpush1.msra.mxu0 0.0
    %1665 = vmatprep.subr.mxu0 0.0
    %1666 = vmatpush1.msra.mxu0 0.0
    %1667 = vmatprep.subr.mxu0 0.0
    %1668 = vmatpush1.msra.mxu0 0.0
    %1669 = vmatprep.subr.mxu0 0.0
    %1670 = vmatpush1.msra.mxu0 0.0
    %1671 = vmatprep.subr.mxu0 0.0
    %1672 = vmatpush1.msra.mxu0 0.0
    %1673 = vmatprep.subr.mxu0 0.0
    %1674 = vmatpush1.msra.mxu0 0.0
    %1675 = vmatprep.subr.mxu0 0.0
    %1676 = vmatpush1.msra.mxu0 0.0
    %1677 = vmatprep.subr.mxu0 0.0
    %1678 = vmatpush1.msra.mxu0 0.0
    %1679 = vmatprep.subr.mxu0 0.0
    %1680 = vmatpush1.msra.mxu0 0.0
    %1681 = vmatprep.subr.mxu0 0.0
    %1682 = vmatpush1.msra.mxu0 0.0
    %1683 = vmatprep.subr.mxu0 0.0
    %1684 = vmatpush1.msra.mxu0 0.0
    %1685 = vmatprep.subr.mxu0 0.0
    %1686 = vmatpush1.msra.mxu0 0.0
    %1687 = vmatprep.subr.mxu0 0.0
    %1688 = vmatpush1.msra.mxu0 0.0
    %1689 = vmatprep.subr.mxu0 0.0
    %1690 = vmatpush1.msra.mxu0 0.0
    %1691 = vmatprep.subr.mxu0 0.0
    %1692 = vmatpush1.msra.mxu0 0.0
    %1693 = vmatprep.subr.mxu0 0.0
    %1694 = vmatpush1.msra.mxu0 0.0
    %1695 = vmatprep.subr.mxu0 0.0
    %1696 = vmatpush1.msra.mxu0 0.0
    %1697 = vmatprep.subr.mxu0 0.0
    %1698 = vmatpush1.msra.mxu0 0.0
    %1699 = vmatprep.subr.mxu0 0.0
    %1700 = vmatpush1.msra.mxu0 0.0
    %1701 = vmatprep.subr.mxu0 0.0
    %1702 = vmatpush1.msra.mxu0 0.0
    %1703 = vmatprep.subr.mxu0 0.0
    %1704 = vmatpush1.msra.mxu0 0.0
    %1705 = vmatprep.subr.mxu0 0.0
    %1706 = vmatpush1.msra.mxu0 0.0
    %1707 = vmatprep.mubr.f32.mxu0 0.0
    %1708 = vmatmul.mubr.f32.gmra.mrb[0].mxu0 %v1570
    %v1709 = vpop.f32.mrb[0].mxu0
    %v1710 = vadd.f32 0.0, %v1709
    %v1711 = vpop.f32.mrb[0].mxu0
    %v1712 = vadd.f32 0.0, %v1711
    %1713 = vdwg.mxu0
    %v1714 = vadd.f32 %v1527, %v1639
    %v1715 = vadd.f32 %v1528, %v1641
    %v1716 = vadd.f32 %v1529, %v1710
    %v1717 = vadd.f32 %v1530, %v1712
    %1718 = vst [vmem:[#allocation2] sm:$0xff] %v1714
    %1719 = vst [vmem:[#allocation2 + $0x8] sm:$0xff] %v1715
    %1720 = vst [vmem:[#allocation2 + $0x10] sm:$0xff] %v1716
    %1721 = vst [vmem:[#allocation2 + $0x18] sm:$0xff] %v1717
    // Predicated region
    $region14: #{tpu_custom_call.1} parent=1 // pred_check
      _
    $region15: #{tpu_custom_call.1} parent=1 // pred_check_branch
      %1723 = sbr.rel (0) target = $region17
    $region16: #{tpu_custom_call.1} parent=1 // pred_region
      %s1725 = ssub.s32 512, 512
      %1726 = vsyncadd [#allocation3], %s1725
      %s1728 = sshll.u32 [#allocation2], 4
      %s1729 = int_to_ptr.vmem [resolvable:$true] %s1728
      %1731 = dma.vmem_to_hbm [thread:$0]  %s1729, 512, %s3, [#allocation3]
    $region17: #{tpu_custom_call.1} parent=1 // pred_fallthru
      _
    // Predicated region
    $region18: #{tpu_custom_call.1} parent=1 // pred_check
      _
    $region19: #{tpu_custom_call.1} parent=1 // pred_check_branch
      %1733 = sbr.rel (0) target = $region21
    $region20: #{tpu_custom_call.1} parent=1 // pred_region
      %1734 = dma.done [#allocation3], 512
    $region21: #{tpu_custom_call.1} parent=1 // pred_fallthru
      _
    %1735 = vsyncpa [#allocation3], 1

</llo_original>
